<compile_context>
chip_gen: v7x
topology: tpu7x:2x2x1
jax: 0.10.0
libtpu: 0.0.40
codegen_flags: <defaults>
</compile_context>

<pallas_src>
import math

import jax
import jax.numpy as jnp
from jax.experimental import pallas as pl
from jax.experimental.pallas import tpu as pltpu

_KT = 5  # temporal kernel width of every (1, 5) convolution


# ---------------------------------------------------------------------------
# Host-side (XLA) weight folding helpers — runtime cost is negligible.
# ---------------------------------------------------------------------------

def _fold_time_conv(w, b, bn):
    # w: (Cout, Cin, 1, KT) -> (KT, Cout, Cin) with eval-mode BN folded in.
    scale, shift = bn
    wt = jnp.transpose(w[:, :, 0, :], (2, 0, 1)) * scale[None, :, None]
    bt = (scale * b + shift)[:, None]
    return wt, bt


# ---------------------------------------------------------------------------
# Fused forward: one pallas_call, grid over batch tiles of BS samples.
# ---------------------------------------------------------------------------

def deepconvnet_forward(x, p, batch_tile=16):
    B, cin, H, T = x.shape
    assert cin == 1, "DeepConvNet expects a single input 'image' channel"
    f32, bf16 = jnp.float32, jnp.bfloat16
    n_classes = p["fw"].shape[0]
    c_final = p["w5"].shape[0]

    # ---- fold conv1 + conv2 + BN1 into a single 5-tap temporal conv --------
    s1, sh1 = p["bn1"]
    w1m = p["w1"][:, 0, 0, :].astype(f32)            # (8, KT)    [c, k]
    w2m = p["w2"][:, :, :, 0].astype(f32)            # (8, 8, H)  [o, c, h]
    w12 = (jnp.einsum("och,ck->koh", w2m, w1m)
           * s1[None, :, None]).astype(bf16)          # (KT, 8, H)
    b12 = ((s1 * (jnp.einsum("och,c->o", w2m, p["b1"]) + p["b2"])
            + sh1)[:, None]).astype(f32)              # (8, 1)

    # ---- blocks 2-4: BN (eval) folded into the temporal convs --------------
    w3t, b3f = _fold_time_conv(p["w3"], p["b3"], p["bn2"])
    w4t, b4f = _fold_time_conv(p["w4"], p["b4"], p["bn3"])
    w5t, b5f = _fold_time_conv(p["w5"], p["b5"], p["bn4"])
    w3t, w4t, w5t = w3t.astype(bf16), w4t.astype(bf16), w5t.astype(bf16)
    b3f, b4f, b5f = b3f.astype(f32), b4f.astype(f32), b5f.astype(f32)

    # ---- valid-time bookkeeping: valid (1,5) conv then floor pool (1,2) ----
    t1 = T - (_KT - 1); tp1 = t1 // 2
    t2 = tp1 - (_KT - 1); tp2 = t2 // 2
    t3 = tp2 - (_KT - 1); tp3 = t3 // 2
    t4 = tp3 - (_KT - 1); tf = t4 // 2
    if min(t1, t2, t3, t4, tf) < 1:
        raise ValueError(f"input length T={T} is too short for DeepConvNet")
    if p["fw"].shape[1] != c_final * tf:
        raise ValueError(
            f"classifier flat_dim={p['fw'].shape[1]} does not match the conv "
            f"stack output {c_final}*{tf}={c_final * tf} for T={T}")

    # Classifier weight sliced per valid time step (PyTorch flatten order c*tf+t).
    fwt = jnp.stack([p["fw"][:, t::tf] for t in range(tf)], axis=0).astype(bf16)
    fbc = p["fb"].astype(f32)[:, None]                # (n_classes, 1)

    # ---- batch tiling: BS samples / grid step, time-major/batch-minor lanes -
    BS = max(1, min(B, batch_tile))
    G = (B + BS - 1) // BS
    Bp = G * BS
    x3 = x[:, 0].astype(f32)
    if Bp != B:
        x3 = jnp.concatenate([x3, jnp.zeros((Bp - B, H, T), f32)], axis=0)
    # (G, BS, H, T) -> (G, H, T, BS) -> (G, H, T*BS): lane index = t*BS + b
    xk = x3.reshape(G, BS, H, T).transpose(0, 2, 3, 1).reshape(G, H, T * BS)

    weights = (w12, b12, w3t, b3f, w4t, b4f, w5t, b5f, fwt, fbc)

    def resident(a):
        # Constant index_map -> DMA'd once, VMEM-resident across the grid.
        nd = a.ndim
        return pl.BlockSpec(a.shape, lambda g, _n=nd: (0,) * _n)

    # -------------------------- the fused kernel ----------------------------
    def kernel(x_ref, w12_ref, b12_ref, w3_ref, b3_ref, w4_ref, b4_ref,
               w5_ref, b5_ref, fwt_ref, fb_ref, o_ref):

        def conv(a, wt_ref, b_ref, stride):
            # 'valid' 5-tap temporal conv at lane-stride `stride`.
            # bf16 operands, f32 MXU accumulation, bias broadcast on lanes.
            lo = a.shape[-1] - (_KT - 1) * stride
            acc = b_ref[...]                                   # (Cout, 1)
            for k in range(_KT):
                acc = acc + jnp.dot(wt_ref[k],
                                    a[:, k * stride:k * stride + lo],
                                    preferred_element_type=jnp.float32)
            return acc                                         # f32 (Cout, lo)

        def pool_elu(h, stride):
            # MaxPool2d((1,2), floor): max of two lane-shifted views; the 2x
            # decimation is carried as a doubled lane-stride (stale lanes are
            # never read again) -> zero MXU FLOPs, no selectors, no gathers.
            # ELU after max == max after ELU (ELU is monotone increasing).
            m = jnp.maximum(h[:, :h.shape[-1] - stride], h[:, stride:])
            return jnp.where(m > 0.0, m, jnp.exp(jnp.minimum(m, 0.0)) - 1.0)

        s = BS                                                 # lane stride
        h = x_ref[0].astype(jnp.bfloat16)                      # (H, T*BS)
        h = conv(h, w12_ref, b12_ref, s)                       # block 1 (conv1+conv2+BN1)
        h = pool_elu(h, s); s *= 2
        h = conv(h.astype(jnp.bfloat16), w3_ref, b3_ref, s)    # block 2
        h = pool_elu(h, s); s *= 2
        h = conv(h.astype(jnp.bfloat16), w4_ref, b4_ref, s)    # block 3
        h = pool_elu(h, s); s *= 2
        h = conv(h.astype(jnp.bfloat16), w5_ref, b5_ref, s)    # block 4
        h = pool_elu(h, s); s *= 2                             # final stride = 16*BS
        h = h.astype(jnp.bfloat16)

        # Flatten (NCHW order) + Linear; Dropout layers are identity in eval.
        logits = fb_ref[...]                                   # (n_classes, 1)
        for t in range(fwt_ref.shape[0]):
            logits = logits + jnp.dot(fwt_ref[t], h[:, t * s:t * s + BS],
                                      preferred_element_type=jnp.float32)
        o_ref[0] = logits                                      # (n_classes, BS)

    out = pl.pallas_call(
        kernel,
        out_shape=jax.ShapeDtypeStruct((G, n_classes, BS), f32),
        grid=(G,),
        in_specs=[pl.BlockSpec((1, H, T * BS), lambda g: (g, 0, 0))]
                 + [resident(w) for w in weights],
        out_specs=pl.BlockSpec((1, n_classes, BS), lambda g: (g, 0, 0)),
        compiler_params=pltpu.CompilerParams(
            dimension_semantics=("parallel",)),
    )(xk, *weights)

    # (G, n_classes, BS) -> (B, n_classes)
    return out.transpose(0, 2, 1).reshape(Bp, n_classes)[:B]


# ---------------------------------------------------------------------------
# Deterministic parameter init (PyTorch-style uniform(-1/sqrt(fan_in), ...))
# ---------------------------------------------------------------------------

def _init_conv(key, cout, cin, kh, kw):
    kw_, kb_ = jax.random.split(key)
    bound = 1.0 / math.sqrt(cin * kh * kw)
    w = jax.random.uniform(kw_, (cout, cin, kh, kw), jnp.float32, -bound, bound)
    b = jax.random.uniform(kb_, (cout,), jnp.float32, -bound, bound)
    return w, b


def _bn_fold(c, eps=1e-5):
    # BatchNorm2d at PyTorch init, eval mode: gamma=1, beta=0, mean=0, var=1
    gamma = jnp.ones((c,), jnp.float32)
    beta = jnp.zeros((c,), jnp.float32)
    mean = jnp.zeros((c,), jnp.float32)
    var = jnp.ones((c,), jnp.float32)
    scale = gamma / jnp.sqrt(var + eps)
    shift = beta - mean * scale
    return scale, shift


def init_params(key, eeg_ch=4, n_classes=2, flat_dim=256):
    keys = jax.random.split(key, 6)
    p = {}
    p["w1"], p["b1"] = _init_conv(keys[0], 8, 1, 1, 5)        # Conv2d(1, 8, (1,5))
    p["w2"], p["b2"] = _init_conv(keys[1], 8, 8, eeg_ch, 1)   # Conv2d(8, 8, (C,1))
    p["bn1"] = _bn_fold(8)
    p["w3"], p["b3"] = _init_conv(keys[2], 16, 8, 1, 5)       # Conv2d(8, 16, (1,5))
    p["bn2"] = _bn_fold(16)
    p["w4"], p["b4"] = _init_conv(keys[3], 32, 16, 1, 5)      # Conv2d(16, 32, (1,5))
    p["bn3"] = _bn_fold(32)
    p["w5"], p["b5"] = _init_conv(keys[4], 64, 32, 1, 5)      # Conv2d(32, 64, (1,5))
    p["bn4"] = _bn_fold(64)
    kfw, kfb = jax.random.split(keys[5])
    bound = 1.0 / math.sqrt(flat_dim)
    p["fw"] = jax.random.uniform(kfw, (n_classes, flat_dim), jnp.float32, -bound, bound)
    p["fb"] = jax.random.uniform(kfb, (n_classes,), jnp.float32, -bound, bound)
    return p


# ---------------------------------------------------------------------------
# Plain-JAX reference (eval-mode semantics) used as an in-script check.
# ---------------------------------------------------------------------------

def _reference_forward(x, p):
    hi = jax.lax.Precision.HIGHEST

    def conv(h, w, b):
        out = jax.lax.conv_general_dilated(
            h, w, window_strides=(1, 1), padding="VALID",
            dimension_numbers=("NCHW", "OIHW", "NCHW"), precision=hi)
        return out + b[None, :, None, None]

    def bn(h, sc_sh):
        sc, sh = sc_sh
        return h * sc[None, :, None, None] + sh[None, :, None, None]

    def pool(h):
        b_, c_, hh, t_ = h.shape
        th = t_ // 2
        return h[..., :2 * th].reshape(b_, c_, hh, th, 2).max(axis=-1)

    elu = jax.nn.elu
    h = conv(x, p["w1"], p["b1"])
    h = conv(h, p["w2"], p["b2"])
    h = pool(elu(bn(h, p["bn1"])))
    h = pool(elu(bn(conv(h, p["w3"], p["b3"]), p["bn2"])))
    h = pool(elu(bn(conv(h, p["w4"], p["b4"]), p["bn3"])))
    h = pool(elu(bn(conv(h, p["w5"], p["b5"]), p["bn4"])))
    flat = h.reshape(h.shape[0], -1)
    return jnp.dot(flat, p["fw"].T, precision=hi) + p["fb"][None, :]


if __name__ == "__main__":
    key = jax.random.PRNGKey(0)
    kx, kp = jax.random.split(key)
    # Small EEG-like input: batch=2, 1 "image" channel, 4 EEG channels, 128 time samples
    x = jax.random.normal(kx, (2, 1, 4, 128), jnp.float32)
    params = init_params(kp, eeg_ch=4, n_classes=2, flat_dim=64 * 4)

    fwd = jax.jit(deepconvnet_forward)
    out = fwd(x, params)
    jax.block_until_ready(out)
    assert out.shape == (2, 2), out.shape

    ref = _reference_forward(x, params)
    err = float(jnp.max(jnp.abs(out - ref)))
    # bf16 MXU operands (f32 accumulation) -> slightly looser tolerance than f32.
    assert err < 5e-2, f"kernel/reference mismatch: max abs err = {err}"
    print("KERNEL_OK")
</pallas_src>

<mosaic_0001>
module attributes {stable_mosaic.version = 11 : i64} {
  func.func @kernel(%arg0: i32, %arg1: memref<1x4x256xf32, #tpu.memory_space<vmem>>, %arg2: memref<5x8x4xbf16, #tpu.memory_space<vmem>>, %arg3: memref<8x1xf32, #tpu.memory_space<vmem>>, %arg4: memref<5x16x8xbf16, #tpu.memory_space<vmem>>, %arg5: memref<16x1xf32, #tpu.memory_space<vmem>>, %arg6: memref<5x32x16xbf16, #tpu.memory_space<vmem>>, %arg7: memref<32x1xf32, #tpu.memory_space<vmem>>, %arg8: memref<5x64x32xbf16, #tpu.memory_space<vmem>>, %arg9: memref<64x1xf32, #tpu.memory_space<vmem>>, %arg10: memref<4x2x64xbf16, #tpu.memory_space<vmem>>, %arg11: memref<2x1xf32, #tpu.memory_space<vmem>>, %arg12: memref<1x2x2xf32, #tpu.memory_space<vmem>>) attributes {dimension_semantics = [#tpu.dimension_semantics<parallel>], iteration_bounds = array<i64: 1>, scalar_prefetch = 0 : i64, scratch_operands = 0 : i64, tpu.core_type = #tpu.core_type<tc>, window_params = [{transform_indices = @transform_0, window_bounds = array<i64: 1, 4, 256>}, {pipeline_mode = #tpu.pipeline_mode<synchronous>, transform_indices = @transform_1, window_bounds = array<i64: 5, 8, 4>}, {pipeline_mode = #tpu.pipeline_mode<synchronous>, transform_indices = @transform_2, window_bounds = array<i64: 8, 1>}, {pipeline_mode = #tpu.pipeline_mode<synchronous>, transform_indices = @transform_3, window_bounds = array<i64: 5, 16, 8>}, {pipeline_mode = #tpu.pipeline_mode<synchronous>, transform_indices = @transform_4, window_bounds = array<i64: 16, 1>}, {pipeline_mode = #tpu.pipeline_mode<synchronous>, transform_indices = @transform_5, window_bounds = array<i64: 5, 32, 16>}, {pipeline_mode = #tpu.pipeline_mode<synchronous>, transform_indices = @transform_6, window_bounds = array<i64: 32, 1>}, {pipeline_mode = #tpu.pipeline_mode<synchronous>, transform_indices = @transform_7, window_bounds = array<i64: 5, 64, 32>}, {pipeline_mode = #tpu.pipeline_mode<synchronous>, transform_indices = @transform_8, window_bounds = array<i64: 64, 1>}, {pipeline_mode = #tpu.pipeline_mode<synchronous>, transform_indices = @transform_9, window_bounds = array<i64: 4, 2, 64>}, {pipeline_mode = #tpu.pipeline_mode<synchronous>, transform_indices = @transform_10, window_bounds = array<i64: 2, 1>}, {transform_indices = @transform_11, window_bounds = array<i64: 1, 2, 2>}]} {
    %c0 = arith.constant 0 : index
    %c0_0 = arith.constant 0 : index
    %c0_1 = arith.constant 0 : index
    %0 = vector.load %arg1[%c0, %c0_0, %c0_1] : memref<1x4x256xf32, #tpu.memory_space<vmem>>, vector<1x4x256xf32>
    %1 = vector.shape_cast %0 : vector<1x4x256xf32> to vector<4x256xf32>
    %2 = arith.truncf %1 : vector<4x256xf32> to vector<4x256xbf16>
    %c0_2 = arith.constant 0 : index
    %c0_3 = arith.constant 0 : index
    %3 = vector.load %arg3[%c0_2, %c0_3] : memref<8x1xf32, #tpu.memory_space<vmem>>, vector<8x1xf32>
    %c0_4 = arith.constant 0 : index
    %c0_5 = arith.constant 0 : index
    %c0_6 = arith.constant 0 : index
    %4 = vector.load %arg2[%c0_4, %c0_5, %c0_6] : memref<5x8x4xbf16, #tpu.memory_space<vmem>>, vector<1x8x4xbf16>
    %5 = vector.shape_cast %4 : vector<1x8x4xbf16> to vector<8x4xbf16>
    %6 = vector.extract_strided_slice %2 {offsets = [0, 0], sizes = [4, 248], strides = [1, 1]} : vector<4x256xbf16> to vector<4x248xbf16>
    %cst = arith.constant dense<0.000000e+00> : vector<8x248xf32>
    %7 = tpu.matmul %5, %6, %cst {dimension_numbers = #tpu.dot_dimension_numbers<[1], [0], [0], [1], [0, 0, 1, 1], [], []>} : vector<8x4xbf16>, vector<4x248xbf16>, vector<8x248xf32> -> vector<8x248xf32>
    %8 = vector.broadcast %3 : vector<8x1xf32> to vector<8x248xf32>
    %9 = arith.addf %8, %7 : vector<8x248xf32>
    %c1 = arith.constant 1 : index
    %c0_7 = arith.constant 0 : index
    %c0_8 = arith.constant 0 : index
    %10 = vector.load %arg2[%c1, %c0_7, %c0_8] : memref<5x8x4xbf16, #tpu.memory_space<vmem>>, vector<1x8x4xbf16>
    %11 = vector.shape_cast %10 : vector<1x8x4xbf16> to vector<8x4xbf16>
    %12 = vector.extract_strided_slice %2 {offsets = [0, 2], sizes = [4, 248], strides = [1, 1]} : vector<4x256xbf16> to vector<4x248xbf16>
    %cst_9 = arith.constant dense<0.000000e+00> : vector<8x248xf32>
    %13 = tpu.matmul %11, %12, %cst_9 {dimension_numbers = #tpu.dot_dimension_numbers<[1], [0], [0], [1], [0, 0, 1, 1], [], []>} : vector<8x4xbf16>, vector<4x248xbf16>, vector<8x248xf32> -> vector<8x248xf32>
    %14 = arith.addf %9, %13 : vector<8x248xf32>
    %c2 = arith.constant 2 : index
    %c0_10 = arith.constant 0 : index
    %c0_11 = arith.constant 0 : index
    %15 = vector.load %arg2[%c2, %c0_10, %c0_11] : memref<5x8x4xbf16, #tpu.memory_space<vmem>>, vector<1x8x4xbf16>
    %16 = vector.shape_cast %15 : vector<1x8x4xbf16> to vector<8x4xbf16>
    %17 = vector.extract_strided_slice %2 {offsets = [0, 4], sizes = [4, 248], strides = [1, 1]} : vector<4x256xbf16> to vector<4x248xbf16>
    %cst_12 = arith.constant dense<0.000000e+00> : vector<8x248xf32>
    %18 = tpu.matmul %16, %17, %cst_12 {dimension_numbers = #tpu.dot_dimension_numbers<[1], [0], [0], [1], [0, 0, 1, 1], [], []>} : vector<8x4xbf16>, vector<4x248xbf16>, vector<8x248xf32> -> vector<8x248xf32>
    %19 = arith.addf %14, %18 : vector<8x248xf32>
    %c3 = arith.constant 3 : index
    %c0_13 = arith.constant 0 : index
    %c0_14 = arith.constant 0 : index
    %20 = vector.load %arg2[%c3, %c0_13, %c0_14] : memref<5x8x4xbf16, #tpu.memory_space<vmem>>, vector<1x8x4xbf16>
    %21 = vector.shape_cast %20 : vector<1x8x4xbf16> to vector<8x4xbf16>
    %22 = vector.extract_strided_slice %2 {offsets = [0, 6], sizes = [4, 248], strides = [1, 1]} : vector<4x256xbf16> to vector<4x248xbf16>
    %cst_15 = arith.constant dense<0.000000e+00> : vector<8x248xf32>
    %23 = tpu.matmul %21, %22, %cst_15 {dimension_numbers = #tpu.dot_dimension_numbers<[1], [0], [0], [1], [0, 0, 1, 1], [], []>} : vector<8x4xbf16>, vector<4x248xbf16>, vector<8x248xf32> -> vector<8x248xf32>
    %24 = arith.addf %19, %23 : vector<8x248xf32>
    %c4 = arith.constant 4 : index
    %c0_16 = arith.constant 0 : index
    %c0_17 = arith.constant 0 : index
    %25 = vector.load %arg2[%c4, %c0_16, %c0_17] : memref<5x8x4xbf16, #tpu.memory_space<vmem>>, vector<1x8x4xbf16>
    %26 = vector.shape_cast %25 : vector<1x8x4xbf16> to vector<8x4xbf16>
    %27 = vector.extract_strided_slice %2 {offsets = [0, 8], sizes = [4, 248], strides = [1, 1]} : vector<4x256xbf16> to vector<4x248xbf16>
    %cst_18 = arith.constant dense<0.000000e+00> : vector<8x248xf32>
    %28 = tpu.matmul %26, %27, %cst_18 {dimension_numbers = #tpu.dot_dimension_numbers<[1], [0], [0], [1], [0, 0, 1, 1], [], []>} : vector<8x4xbf16>, vector<4x248xbf16>, vector<8x248xf32> -> vector<8x248xf32>
    %29 = arith.addf %24, %28 : vector<8x248xf32>
    %30 = vector.extract_strided_slice %29 {offsets = [0, 0], sizes = [8, 246], strides = [1, 1]} : vector<8x248xf32> to vector<8x246xf32>
    %31 = vector.extract_strided_slice %29 {offsets = [0, 2], sizes = [8, 246], strides = [1, 1]} : vector<8x248xf32> to vector<8x246xf32>
    %32 = arith.maximumf %30, %31 : vector<8x246xf32>
    %cst_19 = arith.constant 0.000000e+00 : f32
    %33 = vector.broadcast %cst_19 : f32 to vector<8x246xf32>
    %34 = arith.cmpf ogt, %32, %33 : vector<8x246xf32>
    %cst_20 = arith.constant 0.000000e+00 : f32
    %35 = vector.broadcast %cst_20 : f32 to vector<8x246xf32>
    %36 = arith.minimumf %32, %35 : vector<8x246xf32>
    %37 = math.exp %36 : vector<8x246xf32>
    %cst_21 = arith.constant 1.000000e+00 : f32
    %38 = vector.broadcast %cst_21 : f32 to vector<8x246xf32>
    %39 = arith.subf %37, %38 : vector<8x246xf32>
    %40 = arith.select %34, %32, %39 : vector<8x246xi1>, vector<8x246xf32>
    %41 = arith.truncf %40 : vector<8x246xf32> to vector<8x246xbf16>
    %c0_22 = arith.constant 0 : index
    %c0_23 = arith.constant 0 : index
    %42 = vector.load %arg5[%c0_22, %c0_23] : memref<16x1xf32, #tpu.memory_space<vmem>>, vector<16x1xf32>
    %c0_24 = arith.constant 0 : index
    %c0_25 = arith.constant 0 : index
    %c0_26 = arith.constant 0 : index
    %43 = vector.load %arg4[%c0_24, %c0_25, %c0_26] : memref<5x16x8xbf16, #tpu.memory_space<vmem>>, vector<1x16x8xbf16>
    %44 = vector.shape_cast %43 : vector<1x16x8xbf16> to vector<16x8xbf16>
    %45 = vector.extract_strided_slice %41 {offsets = [0, 0], sizes = [8, 230], strides = [1, 1]} : vector<8x246xbf16> to vector<8x230xbf16>
    %cst_27 = arith.constant dense<0.000000e+00> : vector<16x230xf32>
    %46 = tpu.matmul %44, %45, %cst_27 {dimension_numbers = #tpu.dot_dimension_numbers<[1], [0], [0], [1], [0, 0, 1, 1], [], []>} : vector<16x8xbf16>, vector<8x230xbf16>, vector<16x230xf32> -> vector<16x230xf32>
    %47 = vector.broadcast %42 : vector<16x1xf32> to vector<16x230xf32>
    %48 = arith.addf %47, %46 : vector<16x230xf32>
    %c1_28 = arith.constant 1 : index
    %c0_29 = arith.constant 0 : index
    %c0_30 = arith.constant 0 : index
    %49 = vector.load %arg4[%c1_28, %c0_29, %c0_30] : memref<5x16x8xbf16, #tpu.memory_space<vmem>>, vector<1x16x8xbf16>
    %50 = vector.shape_cast %49 : vector<1x16x8xbf16> to vector<16x8xbf16>
    %51 = vector.extract_strided_slice %41 {offsets = [0, 4], sizes = [8, 230], strides = [1, 1]} : vector<8x246xbf16> to vector<8x230xbf16>
    %cst_31 = arith.constant dense<0.000000e+00> : vector<16x230xf32>
    %52 = tpu.matmul %50, %51, %cst_31 {dimension_numbers = #tpu.dot_dimension_numbers<[1], [0], [0], [1], [0, 0, 1, 1], [], []>} : vector<16x8xbf16>, vector<8x230xbf16>, vector<16x230xf32> -> vector<16x230xf32>
    %53 = arith.addf %48, %52 : vector<16x230xf32>
    %c2_32 = arith.constant 2 : index
    %c0_33 = arith.constant 0 : index
    %c0_34 = arith.constant 0 : index
    %54 = vector.load %arg4[%c2_32, %c0_33, %c0_34] : memref<5x16x8xbf16, #tpu.memory_space<vmem>>, vector<1x16x8xbf16>
    %55 = vector.shape_cast %54 : vector<1x16x8xbf16> to vector<16x8xbf16>
    %56 = vector.extract_strided_slice %41 {offsets = [0, 8], sizes = [8, 230], strides = [1, 1]} : vector<8x246xbf16> to vector<8x230xbf16>
    %cst_35 = arith.constant dense<0.000000e+00> : vector<16x230xf32>
    %57 = tpu.matmul %55, %56, %cst_35 {dimension_numbers = #tpu.dot_dimension_numbers<[1], [0], [0], [1], [0, 0, 1, 1], [], []>} : vector<16x8xbf16>, vector<8x230xbf16>, vector<16x230xf32> -> vector<16x230xf32>
    %58 = arith.addf %53, %57 : vector<16x230xf32>
    %c3_36 = arith.constant 3 : index
    %c0_37 = arith.constant 0 : index
    %c0_38 = arith.constant 0 : index
    %59 = vector.load %arg4[%c3_36, %c0_37, %c0_38] : memref<5x16x8xbf16, #tpu.memory_space<vmem>>, vector<1x16x8xbf16>
    %60 = vector.shape_cast %59 : vector<1x16x8xbf16> to vector<16x8xbf16>
    %61 = vector.extract_strided_slice %41 {offsets = [0, 12], sizes = [8, 230], strides = [1, 1]} : vector<8x246xbf16> to vector<8x230xbf16>
    %cst_39 = arith.constant dense<0.000000e+00> : vector<16x230xf32>
    %62 = tpu.matmul %60, %61, %cst_39 {dimension_numbers = #tpu.dot_dimension_numbers<[1], [0], [0], [1], [0, 0, 1, 1], [], []>} : vector<16x8xbf16>, vector<8x230xbf16>, vector<16x230xf32> -> vector<16x230xf32>
    %63 = arith.addf %58, %62 : vector<16x230xf32>
    %c4_40 = arith.constant 4 : index
    %c0_41 = arith.constant 0 : index
    %c0_42 = arith.constant 0 : index
    %64 = vector.load %arg4[%c4_40, %c0_41, %c0_42] : memref<5x16x8xbf16, #tpu.memory_space<vmem>>, vector<1x16x8xbf16>
    %65 = vector.shape_cast %64 : vector<1x16x8xbf16> to vector<16x8xbf16>
    %66 = vector.extract_strided_slice %41 {offsets = [0, 16], sizes = [8, 230], strides = [1, 1]} : vector<8x246xbf16> to vector<8x230xbf16>
    %cst_43 = arith.constant dense<0.000000e+00> : vector<16x230xf32>
    %67 = tpu.matmul %65, %66, %cst_43 {dimension_numbers = #tpu.dot_dimension_numbers<[1], [0], [0], [1], [0, 0, 1, 1], [], []>} : vector<16x8xbf16>, vector<8x230xbf16>, vector<16x230xf32> -> vector<16x230xf32>
    %68 = arith.addf %63, %67 : vector<16x230xf32>
    %69 = vector.extract_strided_slice %68 {offsets = [0, 0], sizes = [16, 226], strides = [1, 1]} : vector<16x230xf32> to vector<16x226xf32>
    %70 = vector.extract_strided_slice %68 {offsets = [0, 4], sizes = [16, 226], strides = [1, 1]} : vector<16x230xf32> to vector<16x226xf32>
    %71 = arith.maximumf %69, %70 : vector<16x226xf32>
    %cst_44 = arith.constant 0.000000e+00 : f32
    %72 = vector.broadcast %cst_44 : f32 to vector<16x226xf32>
    %73 = arith.cmpf ogt, %71, %72 : vector<16x226xf32>
    %cst_45 = arith.constant 0.000000e+00 : f32
    %74 = vector.broadcast %cst_45 : f32 to vector<16x226xf32>
    %75 = arith.minimumf %71, %74 : vector<16x226xf32>
    %76 = math.exp %75 : vector<16x226xf32>
    %cst_46 = arith.constant 1.000000e+00 : f32
    %77 = vector.broadcast %cst_46 : f32 to vector<16x226xf32>
    %78 = arith.subf %76, %77 : vector<16x226xf32>
    %79 = arith.select %73, %71, %78 : vector<16x226xi1>, vector<16x226xf32>
    %80 = arith.truncf %79 : vector<16x226xf32> to vector<16x226xbf16>
    %c0_47 = arith.constant 0 : index
    %c0_48 = arith.constant 0 : index
    %81 = vector.load %arg7[%c0_47, %c0_48] : memref<32x1xf32, #tpu.memory_space<vmem>>, vector<32x1xf32>
    %c0_49 = arith.constant 0 : index
    %c0_50 = arith.constant 0 : index
    %c0_51 = arith.constant 0 : index
    %82 = vector.load %arg6[%c0_49, %c0_50, %c0_51] : memref<5x32x16xbf16, #tpu.memory_space<vmem>>, vector<1x32x16xbf16>
    %83 = vector.shape_cast %82 : vector<1x32x16xbf16> to vector<32x16xbf16>
    %84 = vector.extract_strided_slice %80 {offsets = [0, 0], sizes = [16, 194], strides = [1, 1]} : vector<16x226xbf16> to vector<16x194xbf16>
    %cst_52 = arith.constant dense<0.000000e+00> : vector<32x194xf32>
    %85 = tpu.matmul %83, %84, %cst_52 {dimension_numbers = #tpu.dot_dimension_numbers<[1], [0], [0], [1], [0, 0, 1, 1], [], []>} : vector<32x16xbf16>, vector<16x194xbf16>, vector<32x194xf32> -> vector<32x194xf32>
    %86 = vector.broadcast %81 : vector<32x1xf32> to vector<32x194xf32>
    %87 = arith.addf %86, %85 : vector<32x194xf32>
    %c1_53 = arith.constant 1 : index
    %c0_54 = arith.constant 0 : index
    %c0_55 = arith.constant 0 : index
    %88 = vector.load %arg6[%c1_53, %c0_54, %c0_55] : memref<5x32x16xbf16, #tpu.memory_space<vmem>>, vector<1x32x16xbf16>
    %89 = vector.shape_cast %88 : vector<1x32x16xbf16> to vector<32x16xbf16>
    %90 = vector.extract_strided_slice %80 {offsets = [0, 8], sizes = [16, 194], strides = [1, 1]} : vector<16x226xbf16> to vector<16x194xbf16>
    %cst_56 = arith.constant dense<0.000000e+00> : vector<32x194xf32>
    %91 = tpu.matmul %89, %90, %cst_56 {dimension_numbers = #tpu.dot_dimension_numbers<[1], [0], [0], [1], [0, 0, 1, 1], [], []>} : vector<32x16xbf16>, vector<16x194xbf16>, vector<32x194xf32> -> vector<32x194xf32>
    %92 = arith.addf %87, %91 : vector<32x194xf32>
    %c2_57 = arith.constant 2 : index
    %c0_58 = arith.constant 0 : index
    %c0_59 = arith.constant 0 : index
    %93 = vector.load %arg6[%c2_57, %c0_58, %c0_59] : memref<5x32x16xbf16, #tpu.memory_space<vmem>>, vector<1x32x16xbf16>
    %94 = vector.shape_cast %93 : vector<1x32x16xbf16> to vector<32x16xbf16>
    %95 = vector.extract_strided_slice %80 {offsets = [0, 16], sizes = [16, 194], strides = [1, 1]} : vector<16x226xbf16> to vector<16x194xbf16>
    %cst_60 = arith.constant dense<0.000000e+00> : vector<32x194xf32>
    %96 = tpu.matmul %94, %95, %cst_60 {dimension_numbers = #tpu.dot_dimension_numbers<[1], [0], [0], [1], [0, 0, 1, 1], [], []>} : vector<32x16xbf16>, vector<16x194xbf16>, vector<32x194xf32> -> vector<32x194xf32>
    %97 = arith.addf %92, %96 : vector<32x194xf32>
    %c3_61 = arith.constant 3 : index
    %c0_62 = arith.constant 0 : index
    %c0_63 = arith.constant 0 : index
    %98 = vector.load %arg6[%c3_61, %c0_62, %c0_63] : memref<5x32x16xbf16, #tpu.memory_space<vmem>>, vector<1x32x16xbf16>
    %99 = vector.shape_cast %98 : vector<1x32x16xbf16> to vector<32x16xbf16>
    %100 = vector.extract_strided_slice %80 {offsets = [0, 24], sizes = [16, 194], strides = [1, 1]} : vector<16x226xbf16> to vector<16x194xbf16>
    %cst_64 = arith.constant dense<0.000000e+00> : vector<32x194xf32>
    %101 = tpu.matmul %99, %100, %cst_64 {dimension_numbers = #tpu.dot_dimension_numbers<[1], [0], [0], [1], [0, 0, 1, 1], [], []>} : vector<32x16xbf16>, vector<16x194xbf16>, vector<32x194xf32> -> vector<32x194xf32>
    %102 = arith.addf %97, %101 : vector<32x194xf32>
    %c4_65 = arith.constant 4 : index
    %c0_66 = arith.constant 0 : index
    %c0_67 = arith.constant 0 : index
    %103 = vector.load %arg6[%c4_65, %c0_66, %c0_67] : memref<5x32x16xbf16, #tpu.memory_space<vmem>>, vector<1x32x16xbf16>
    %104 = vector.shape_cast %103 : vector<1x32x16xbf16> to vector<32x16xbf16>
    %105 = vector.extract_strided_slice %80 {offsets = [0, 32], sizes = [16, 194], strides = [1, 1]} : vector<16x226xbf16> to vector<16x194xbf16>
    %cst_68 = arith.constant dense<0.000000e+00> : vector<32x194xf32>
    %106 = tpu.matmul %104, %105, %cst_68 {dimension_numbers = #tpu.dot_dimension_numbers<[1], [0], [0], [1], [0, 0, 1, 1], [], []>} : vector<32x16xbf16>, vector<16x194xbf16>, vector<32x194xf32> -> vector<32x194xf32>
    %107 = arith.addf %102, %106 : vector<32x194xf32>
    %108 = vector.extract_strided_slice %107 {offsets = [0, 0], sizes = [32, 186], strides = [1, 1]} : vector<32x194xf32> to vector<32x186xf32>
    %109 = vector.extract_strided_slice %107 {offsets = [0, 8], sizes = [32, 186], strides = [1, 1]} : vector<32x194xf32> to vector<32x186xf32>
    %110 = arith.maximumf %108, %109 : vector<32x186xf32>
    %cst_69 = arith.constant 0.000000e+00 : f32
    %111 = vector.broadcast %cst_69 : f32 to vector<32x186xf32>
    %112 = arith.cmpf ogt, %110, %111 : vector<32x186xf32>
    %cst_70 = arith.constant 0.000000e+00 : f32
    %113 = vector.broadcast %cst_70 : f32 to vector<32x186xf32>
    %114 = arith.minimumf %110, %113 : vector<32x186xf32>
    %115 = math.exp %114 : vector<32x186xf32>
    %cst_71 = arith.constant 1.000000e+00 : f32
    %116 = vector.broadcast %cst_71 : f32 to vector<32x186xf32>
    %117 = arith.subf %115, %116 : vector<32x186xf32>
    %118 = arith.select %112, %110, %117 : vector<32x186xi1>, vector<32x186xf32>
    %119 = arith.truncf %118 : vector<32x186xf32> to vector<32x186xbf16>
    %c0_72 = arith.constant 0 : index
    %c0_73 = arith.constant 0 : index
    %120 = vector.load %arg9[%c0_72, %c0_73] : memref<64x1xf32, #tpu.memory_space<vmem>>, vector<64x1xf32>
    %c0_74 = arith.constant 0 : index
    %c0_75 = arith.constant 0 : index
    %c0_76 = arith.constant 0 : index
    %121 = vector.load %arg8[%c0_74, %c0_75, %c0_76] : memref<5x64x32xbf16, #tpu.memory_space<vmem>>, vector<1x64x32xbf16>
    %122 = vector.shape_cast %121 : vector<1x64x32xbf16> to vector<64x32xbf16>
    %123 = vector.extract_strided_slice %119 {offsets = [0, 0], sizes = [32, 122], strides = [1, 1]} : vector<32x186xbf16> to vector<32x122xbf16>
    %cst_77 = arith.constant dense<0.000000e+00> : vector<64x122xf32>
    %124 = tpu.matmul %122, %123, %cst_77 {dimension_numbers = #tpu.dot_dimension_numbers<[1], [0], [0], [1], [0, 0, 1, 1], [], []>} : vector<64x32xbf16>, vector<32x122xbf16>, vector<64x122xf32> -> vector<64x122xf32>
    %125 = vector.broadcast %120 : vector<64x1xf32> to vector<64x122xf32>
    %126 = arith.addf %125, %124 : vector<64x122xf32>
    %c1_78 = arith.constant 1 : index
    %c0_79 = arith.constant 0 : index
    %c0_80 = arith.constant 0 : index
    %127 = vector.load %arg8[%c1_78, %c0_79, %c0_80] : memref<5x64x32xbf16, #tpu.memory_space<vmem>>, vector<1x64x32xbf16>
    %128 = vector.shape_cast %127 : vector<1x64x32xbf16> to vector<64x32xbf16>
    %129 = vector.extract_strided_slice %119 {offsets = [0, 16], sizes = [32, 122], strides = [1, 1]} : vector<32x186xbf16> to vector<32x122xbf16>
    %cst_81 = arith.constant dense<0.000000e+00> : vector<64x122xf32>
    %130 = tpu.matmul %128, %129, %cst_81 {dimension_numbers = #tpu.dot_dimension_numbers<[1], [0], [0], [1], [0, 0, 1, 1], [], []>} : vector<64x32xbf16>, vector<32x122xbf16>, vector<64x122xf32> -> vector<64x122xf32>
    %131 = arith.addf %126, %130 : vector<64x122xf32>
    %c2_82 = arith.constant 2 : index
    %c0_83 = arith.constant 0 : index
    %c0_84 = arith.constant 0 : index
    %132 = vector.load %arg8[%c2_82, %c0_83, %c0_84] : memref<5x64x32xbf16, #tpu.memory_space<vmem>>, vector<1x64x32xbf16>
    %133 = vector.shape_cast %132 : vector<1x64x32xbf16> to vector<64x32xbf16>
    %134 = vector.extract_strided_slice %119 {offsets = [0, 32], sizes = [32, 122], strides = [1, 1]} : vector<32x186xbf16> to vector<32x122xbf16>
    %cst_85 = arith.constant dense<0.000000e+00> : vector<64x122xf32>
    %135 = tpu.matmul %133, %134, %cst_85 {dimension_numbers = #tpu.dot_dimension_numbers<[1], [0], [0], [1], [0, 0, 1, 1], [], []>} : vector<64x32xbf16>, vector<32x122xbf16>, vector<64x122xf32> -> vector<64x122xf32>
    %136 = arith.addf %131, %135 : vector<64x122xf32>
    %c3_86 = arith.constant 3 : index
    %c0_87 = arith.constant 0 : index
    %c0_88 = arith.constant 0 : index
    %137 = vector.load %arg8[%c3_86, %c0_87, %c0_88] : memref<5x64x32xbf16, #tpu.memory_space<vmem>>, vector<1x64x32xbf16>
    %138 = vector.shape_cast %137 : vector<1x64x32xbf16> to vector<64x32xbf16>
    %139 = vector.extract_strided_slice %119 {offsets = [0, 48], sizes = [32, 122], strides = [1, 1]} : vector<32x186xbf16> to vector<32x122xbf16>
    %cst_89 = arith.constant dense<0.000000e+00> : vector<64x122xf32>
    %140 = tpu.matmul %138, %139, %cst_89 {dimension_numbers = #tpu.dot_dimension_numbers<[1], [0], [0], [1], [0, 0, 1, 1], [], []>} : vector<64x32xbf16>, vector<32x122xbf16>, vector<64x122xf32> -> vector<64x122xf32>
    %141 = arith.addf %136, %140 : vector<64x122xf32>
    %c4_90 = arith.constant 4 : index
    %c0_91 = arith.constant 0 : index
    %c0_92 = arith.constant 0 : index
    %142 = vector.load %arg8[%c4_90, %c0_91, %c0_92] : memref<5x64x32xbf16, #tpu.memory_space<vmem>>, vector<1x64x32xbf16>
    %143 = vector.shape_cast %142 : vector<1x64x32xbf16> to vector<64x32xbf16>
    %144 = vector.extract_strided_slice %119 {offsets = [0, 64], sizes = [32, 122], strides = [1, 1]} : vector<32x186xbf16> to vector<32x122xbf16>
    %cst_93 = arith.constant dense<0.000000e+00> : vector<64x122xf32>
    %145 = tpu.matmul %143, %144, %cst_93 {dimension_numbers = #tpu.dot_dimension_numbers<[1], [0], [0], [1], [0, 0, 1, 1], [], []>} : vector<64x32xbf16>, vector<32x122xbf16>, vector<64x122xf32> -> vector<64x122xf32>
    %146 = arith.addf %141, %145 : vector<64x122xf32>
    %147 = vector.extract_strided_slice %146 {offsets = [0, 0], sizes = [64, 106], strides = [1, 1]} : vector<64x122xf32> to vector<64x106xf32>
    %148 = vector.extract_strided_slice %146 {offsets = [0, 16], sizes = [64, 106], strides = [1, 1]} : vector<64x122xf32> to vector<64x106xf32>
    %149 = arith.maximumf %147, %148 : vector<64x106xf32>
    %cst_94 = arith.constant 0.000000e+00 : f32
    %150 = vector.broadcast %cst_94 : f32 to vector<64x106xf32>
    %151 = arith.cmpf ogt, %149, %150 : vector<64x106xf32>
    %cst_95 = arith.constant 0.000000e+00 : f32
    %152 = vector.broadcast %cst_95 : f32 to vector<64x106xf32>
    %153 = arith.minimumf %149, %152 : vector<64x106xf32>
    %154 = math.exp %153 : vector<64x106xf32>
    %cst_96 = arith.constant 1.000000e+00 : f32
    %155 = vector.broadcast %cst_96 : f32 to vector<64x106xf32>
    %156 = arith.subf %154, %155 : vector<64x106xf32>
    %157 = arith.select %151, %149, %156 : vector<64x106xi1>, vector<64x106xf32>
    %158 = arith.truncf %157 : vector<64x106xf32> to vector<64x106xbf16>
    %c0_97 = arith.constant 0 : index
    %c0_98 = arith.constant 0 : index
    %159 = vector.load %arg11[%c0_97, %c0_98] : memref<2x1xf32, #tpu.memory_space<vmem>>, vector<2x1xf32>
    %c0_99 = arith.constant 0 : index
    %c0_100 = arith.constant 0 : index
    %c0_101 = arith.constant 0 : index
    %160 = vector.load %arg10[%c0_99, %c0_100, %c0_101] : memref<4x2x64xbf16, #tpu.memory_space<vmem>>, vector<1x2x64xbf16>
    %161 = vector.shape_cast %160 : vector<1x2x64xbf16> to vector<2x64xbf16>
    %162 = vector.extract_strided_slice %158 {offsets = [0, 0], sizes = [64, 2], strides = [1, 1]} : vector<64x106xbf16> to vector<64x2xbf16>
    %cst_102 = arith.constant dense<0.000000e+00> : vector<2x2xf32>
    %163 = tpu.matmul %161, %162, %cst_102 {dimension_numbers = #tpu.dot_dimension_numbers<[1], [0], [0], [1], [0, 0, 1, 1], [], []>} : vector<2x64xbf16>, vector<64x2xbf16>, vector<2x2xf32> -> vector<2x2xf32>
    %164 = vector.broadcast %159 : vector<2x1xf32> to vector<2x2xf32>
    %165 = arith.addf %164, %163 : vector<2x2xf32>
    %c1_103 = arith.constant 1 : index
    %c0_104 = arith.constant 0 : index
    %c0_105 = arith.constant 0 : index
    %166 = vector.load %arg10[%c1_103, %c0_104, %c0_105] : memref<4x2x64xbf16, #tpu.memory_space<vmem>>, vector<1x2x64xbf16>
    %167 = vector.shape_cast %166 : vector<1x2x64xbf16> to vector<2x64xbf16>
    %168 = vector.extract_strided_slice %158 {offsets = [0, 32], sizes = [64, 2], strides = [1, 1]} : vector<64x106xbf16> to vector<64x2xbf16>
    %cst_106 = arith.constant dense<0.000000e+00> : vector<2x2xf32>
    %169 = tpu.matmul %167, %168, %cst_106 {dimension_numbers = #tpu.dot_dimension_numbers<[1], [0], [0], [1], [0, 0, 1, 1], [], []>} : vector<2x64xbf16>, vector<64x2xbf16>, vector<2x2xf32> -> vector<2x2xf32>
    %170 = arith.addf %165, %169 : vector<2x2xf32>
    %c2_107 = arith.constant 2 : index
    %c0_108 = arith.constant 0 : index
    %c0_109 = arith.constant 0 : index
    %171 = vector.load %arg10[%c2_107, %c0_108, %c0_109] : memref<4x2x64xbf16, #tpu.memory_space<vmem>>, vector<1x2x64xbf16>
    %172 = vector.shape_cast %171 : vector<1x2x64xbf16> to vector<2x64xbf16>
    %173 = vector.extract_strided_slice %158 {offsets = [0, 64], sizes = [64, 2], strides = [1, 1]} : vector<64x106xbf16> to vector<64x2xbf16>
    %cst_110 = arith.constant dense<0.000000e+00> : vector<2x2xf32>
    %174 = tpu.matmul %172, %173, %cst_110 {dimension_numbers = #tpu.dot_dimension_numbers<[1], [0], [0], [1], [0, 0, 1, 1], [], []>} : vector<2x64xbf16>, vector<64x2xbf16>, vector<2x2xf32> -> vector<2x2xf32>
    %175 = arith.addf %170, %174 : vector<2x2xf32>
    %c3_111 = arith.constant 3 : index
    %c0_112 = arith.constant 0 : index
    %c0_113 = arith.constant 0 : index
    %176 = vector.load %arg10[%c3_111, %c0_112, %c0_113] : memref<4x2x64xbf16, #tpu.memory_space<vmem>>, vector<1x2x64xbf16>
    %177 = vector.shape_cast %176 : vector<1x2x64xbf16> to vector<2x64xbf16>
    %178 = vector.extract_strided_slice %158 {offsets = [0, 96], sizes = [64, 2], strides = [1, 1]} : vector<64x106xbf16> to vector<64x2xbf16>
    %cst_114 = arith.constant dense<0.000000e+00> : vector<2x2xf32>
    %179 = tpu.matmul %177, %178, %cst_114 {dimension_numbers = #tpu.dot_dimension_numbers<[1], [0], [0], [1], [0, 0, 1, 1], [], []>} : vector<2x64xbf16>, vector<64x2xbf16>, vector<2x2xf32> -> vector<2x2xf32>
    %180 = arith.addf %175, %179 : vector<2x2xf32>
    %c0_115 = arith.constant 0 : index
    %c0_116 = arith.constant 0 : index
    %c0_117 = arith.constant 0 : index
    %181 = vector.load %arg12[%c0_115, %c0_116, %c0_117] : memref<1x2x2xf32, #tpu.memory_space<vmem>>, vector<1x2x2xf32>
    %182 = vector.shape_cast %181 : vector<1x2x2xf32> to vector<2x2xf32>
    %183 = vector.shape_cast %180 : vector<2x2xf32> to vector<1x2x2xf32>
    tpu.vector_store %arg12[%c0_115, %c0_116, %c0_117], %183 {strides = array<i32>} : memref<1x2x2xf32, #tpu.memory_space<vmem>>, vector<1x2x2xf32>,
    return
  }
  func.func @transform_0(%arg0: i32) -> (i32, i32, i32) {
    %c0_i32 = arith.constant 0 : i32
    %c0_i32_0 = arith.constant 0 : i32
    %c0_i32_1 = arith.constant 0 : i32
    return %arg0, %c0_i32, %c0_i32_0 : i32, i32, i32
  }
  func.func @transform_1(%arg0: i32) -> (i32, i32, i32) {
    %c0_i32 = arith.constant 0 : i32
    %c0_i32_0 = arith.constant 0 : i32
    %c0_i32_1 = arith.constant 0 : i32
    %c0_i32_2 = arith.constant 0 : i32
    return %c0_i32, %c0_i32_0, %c0_i32_1 : i32, i32, i32
  }
  func.func @transform_2(%arg0: i32) -> (i32, i32) {
    %c0_i32 = arith.constant 0 : i32
    %c0_i32_0 = arith.constant 0 : i32
    %c0_i32_1 = arith.constant 0 : i32
    return %c0_i32, %c0_i32_0 : i32, i32
  }
  func.func @transform_3(%arg0: i32) -> (i32, i32, i32) {
    %c0_i32 = arith.constant 0 : i32
    %c0_i32_0 = arith.constant 0 : i32
    %c0_i32_1 = arith.constant 0 : i32
    %c0_i32_2 = arith.constant 0 : i32
    return %c0_i32, %c0_i32_0, %c0_i32_1 : i32, i32, i32
  }
  func.func @transform_4(%arg0: i32) -> (i32, i32) {
    %c0_i32 = arith.constant 0 : i32
    %c0_i32_0 = arith.constant 0 : i32
    %c0_i32_1 = arith.constant 0 : i32
    return %c0_i32, %c0_i32_0 : i32, i32
  }
  func.func @transform_5(%arg0: i32) -> (i32, i32, i32) {
    %c0_i32 = arith.constant 0 : i32
    %c0_i32_0 = arith.constant 0 : i32
    %c0_i32_1 = arith.constant 0 : i32
    %c0_i32_2 = arith.constant 0 : i32
    return %c0_i32, %c0_i32_0, %c0_i32_1 : i32, i32, i32
  }
  func.func @transform_6(%arg0: i32) -> (i32, i32) {
    %c0_i32 = arith.constant 0 : i32
    %c0_i32_0 = arith.constant 0 : i32
    %c0_i32_1 = arith.constant 0 : i32
    return %c0_i32, %c0_i32_0 : i32, i32
  }
  func.func @transform_7(%arg0: i32) -> (i32, i32, i32) {
    %c0_i32 = arith.constant 0 : i32
    %c0_i32_0 = arith.constant 0 : i32
    %c0_i32_1 = arith.constant 0 : i32
    %c0_i32_2 = arith.constant 0 : i32
    return %c0_i32, %c0_i32_0, %c0_i32_1 : i32, i32, i32
  }
  func.func @transform_8(%arg0: i32) -> (i32, i32) {
    %c0_i32 = arith.constant 0 : i32
    %c0_i32_0 = arith.constant 0 : i32
    %c0_i32_1 = arith.constant 0 : i32
    return %c0_i32, %c0_i32_0 : i32, i32
  }
  func.func @transform_9(%arg0: i32) -> (i32, i32, i32) {
    %c0_i32 = arith.constant 0 : i32
    %c0_i32_0 = arith.constant 0 : i32
    %c0_i32_1 = arith.constant 0 : i32
    %c0_i32_2 = arith.constant 0 : i32
    return %c0_i32, %c0_i32_0, %c0_i32_1 : i32, i32, i32
  }
  func.func @transform_10(%arg0: i32) -> (i32, i32) {
    %c0_i32 = arith.constant 0 : i32
    %c0_i32_0 = arith.constant 0 : i32
    %c0_i32_1 = arith.constant 0 : i32
    return %c0_i32, %c0_i32_0 : i32, i32
  }
  func.func @transform_11(%arg0: i32) -> (i32, i32, i32) {
    %c0_i32 = arith.constant 0 : i32
    %c0_i32_0 = arith.constant 0 : i32
    %c0_i32_1 = arith.constant 0 : i32
    return %arg0, %c0_i32, %c0_i32_0 : i32, i32, i32
  }
}

</mosaic_0001>

<llo_original>
// kernel: deepconvnet_forward.1
$region0: #{deepconvnet_forward.1}
  #allocation0 [shape = 'u32[]', space=smem, size = 0x4, offset = 0x4, fixed_abs, tag = 'smem constant byte address 0x4 - core index']
  #allocation1 [shape = 'u32[144,128]{1,0:T(1,128)}', space=vmem, size = 0x12000, scoped, tag = 'internal scratch']
  %s0 = inlined_call_operand.vmem [shape: f32[1,4,256], index: 0, kind: input, shape index: {}]
  %s1 = inlined_call_operand.vmem [shape: bf16[5,8,4], index: 1, kind: input, shape index: {}]
  %s2 = inlined_call_operand.vmem [shape: f32[8,1], index: 2, kind: input, shape index: {}]
  %s3 = inlined_call_operand.vmem [shape: bf16[5,16,8], index: 3, kind: input, shape index: {}]
  %s4 = inlined_call_operand.vmem [shape: f32[16,1], index: 4, kind: input, shape index: {}]
  %s5 = inlined_call_operand.vmem [shape: bf16[5,32,16], index: 5, kind: input, shape index: {}]
  %s6 = inlined_call_operand.vmem [shape: f32[32,1], index: 6, kind: input, shape index: {}]
  %s7 = inlined_call_operand.vmem [shape: bf16[5,64,32], index: 7, kind: input, shape index: {}]
  %s8 = inlined_call_operand.vmem [shape: f32[64,1], index: 8, kind: input, shape index: {}]
  %s9 = inlined_call_operand.vmem [shape: bf16[4,2,64], index: 9, kind: input, shape index: {}]
  %s10 = inlined_call_operand.vmem [shape: f32[2,1], index: 10, kind: input, shape index: {}]
  %s11 = inlined_call_operand.vmem [shape: f32[1,2,2], index: 11, kind: output, shape index: {}]
  %s12 = sld [smem:[#allocation0]]
  $region54: #{deepconvnet_forward.1} parent=0
    _
  %s14 = ssub.s32 1, %s12
  %s15 = scalar_select 0, %s14, %s12
  // Predicated region
  $region2: #{deepconvnet_forward.1} parent=0 // pred_check
    _
  $region3: #{deepconvnet_forward.1} parent=0 // pred_check_branch
    %17 = sbr.rel (0) target = $region5
  $region4: #{deepconvnet_forward.1} parent=0 // pred_region
    _
  $region5: #{deepconvnet_forward.1} parent=0 // pred_fallthru
    _
  // Predicated region
  $region6: #{deepconvnet_forward.1} parent=0 // pred_check
    _
  $region7: #{deepconvnet_forward.1} parent=0 // pred_check_branch
    %19 = sbr.rel (0) target = $region9
  $region8: #{deepconvnet_forward.1} parent=0 // pred_region
    _
  $region9: #{deepconvnet_forward.1} parent=0 // pred_fallthru
    _
  // Predicated region
  $region10: #{deepconvnet_forward.1} parent=0 // pred_check
    _
  $region11: #{deepconvnet_forward.1} parent=0 // pred_check_branch
    %21 = sbr.rel (0) target = $region13
  $region12: #{deepconvnet_forward.1} parent=0 // pred_region
    _
  $region13: #{deepconvnet_forward.1} parent=0 // pred_fallthru
    _
  // Predicated region
  $region14: #{deepconvnet_forward.1} parent=0 // pred_check
    _
  $region15: #{deepconvnet_forward.1} parent=0 // pred_check_branch
    %23 = sbr.rel (0) target = $region17
  $region16: #{deepconvnet_forward.1} parent=0 // pred_region
    _
  $region17: #{deepconvnet_forward.1} parent=0 // pred_fallthru
    _
  // Predicated region
  $region18: #{deepconvnet_forward.1} parent=0 // pred_check
    _
  $region19: #{deepconvnet_forward.1} parent=0 // pred_check_branch
    %25 = sbr.rel (0) target = $region21
  $region20: #{deepconvnet_forward.1} parent=0 // pred_region
    _
  $region21: #{deepconvnet_forward.1} parent=0 // pred_fallthru
    _
  // Predicated region
  $region22: #{deepconvnet_forward.1} parent=0 // pred_check
    _
  $region23: #{deepconvnet_forward.1} parent=0 // pred_check_branch
    %27 = sbr.rel (0) target = $region25
  $region24: #{deepconvnet_forward.1} parent=0 // pred_region
    _
  $region25: #{deepconvnet_forward.1} parent=0 // pred_fallthru
    _
  // Predicated region
  $region26: #{deepconvnet_forward.1} parent=0 // pred_check
    _
  $region27: #{deepconvnet_forward.1} parent=0 // pred_check_branch
    %29 = sbr.rel (0) target = $region29
  $region28: #{deepconvnet_forward.1} parent=0 // pred_region
    _
  $region29: #{deepconvnet_forward.1} parent=0 // pred_fallthru
    _
  // Predicated region
  $region30: #{deepconvnet_forward.1} parent=0 // pred_check
    _
  $region31: #{deepconvnet_forward.1} parent=0 // pred_check_branch
    %31 = sbr.rel (0) target = $region33
  $region32: #{deepconvnet_forward.1} parent=0 // pred_region
    _
  $region33: #{deepconvnet_forward.1} parent=0 // pred_fallthru
    _
  // Predicated region
  $region34: #{deepconvnet_forward.1} parent=0 // pred_check
    _
  $region35: #{deepconvnet_forward.1} parent=0 // pred_check_branch
    %33 = sbr.rel (0) target = $region37
  $region36: #{deepconvnet_forward.1} parent=0 // pred_region
    _
  $region37: #{deepconvnet_forward.1} parent=0 // pred_fallthru
    _
  // Predicated region
  $region38: #{deepconvnet_forward.1} parent=0 // pred_check
    _
  $region39: #{deepconvnet_forward.1} parent=0 // pred_check_branch
    %35 = sbr.rel (0) target = $region41
  $region40: #{deepconvnet_forward.1} parent=0 // pred_region
    _
  $region41: #{deepconvnet_forward.1} parent=0 // pred_fallthru
    _
  // Predicated region
  $region42: #{deepconvnet_forward.1} parent=0 // pred_check
    _
  $region43: #{deepconvnet_forward.1} parent=0 // pred_check_branch
    %37 = sbr.rel (0) target = $region45
  $region44: #{deepconvnet_forward.1} parent=0 // pred_region
    _
  $region45: #{deepconvnet_forward.1} parent=0 // pred_fallthru
    _
  %v39 = vld [vmem:[%s0] sm:$0xff]
  %v41 = vcombine.high %v39, %v39
  %v43 = vpack.c.bf16 %v39, %v39
  %v44 = vpack.c.bf16 %v41, %v41
  %v45 = vld [vmem:[%s2] sm:$0xff]
  %v46 = vld [vmem:[%s1] sm:$0xf]
  %vm47 = vcmask 31744
  %v49 = vsel %vm47, %v46, 0
  %vm51 = vcmask 1041408
  %v53 = vsel %vm51, %v43, 0
  %v56 = vsel %vm51, %v44, 0
  %58 = vmatprep.subr.bf16.mxu0 %v56
  %59 = vmatpush1.bf16.msra.mxu0 %v53
  %60 = vmatprep.subr.bf16.mxu0 0
  %61 = vmatpush1.bf16.msra.mxu0 0
  %62 = vmatprep.subr.bf16.mxu0 0
  %63 = vmatpush1.bf16.msra.mxu0 0
  %64 = vmatprep.subr.bf16.mxu0 0
  %65 = vmatpush1.bf16.msra.mxu0 0
  %66 = vmatprep.subr.bf16.mxu0 0
  %67 = vmatpush1.bf16.msra.mxu0 0
  %68 = vmatprep.subr.bf16.mxu0 0
  %69 = vmatpush1.bf16.msra.mxu0 0
  %70 = vmatprep.subr.bf16.mxu0 0
  %71 = vmatpush1.bf16.msra.mxu0 0
  %72 = vmatprep.subr.bf16.mxu0 0
  %73 = vmatpush1.bf16.msra.mxu0 0
  %74 = vmatprep.subr.bf16.mxu0 0
  %75 = vmatpush1.bf16.msra.mxu0 0
  %76 = vmatprep.subr.bf16.mxu0 0
  %77 = vmatpush1.bf16.msra.mxu0 0
  %78 = vmatprep.subr.bf16.mxu0 0
  %79 = vmatpush1.bf16.msra.mxu0 0
  %80 = vmatprep.subr.bf16.mxu0 0
  %81 = vmatpush1.bf16.msra.mxu0 0
  %82 = vmatprep.subr.bf16.mxu0 0
  %83 = vmatpush1.bf16.msra.mxu0 0
  %84 = vmatprep.subr.bf16.mxu0 0
  %85 = vmatpush1.bf16.msra.mxu0 0
  %86 = vmatprep.subr.bf16.mxu0 0
  %87 = vmatpush1.bf16.msra.mxu0 0
  %88 = vmatprep.subr.bf16.mxu0 0
  %89 = vmatpush1.bf16.msra.mxu0 0
  %90 = vmatprep.mubr.bf16.mxu0 0
  %91 = vmatmul.mubr.bf16.gmra.mrb[0].mxu0 %v49
  %v92 = vpop.f32.mrb[0].mxu0
  %v93 = vadd.f32 0.0, %v92
  %v94 = vpop.f32.mrb[0].mxu0
  %v95 = vadd.f32 0.0, %v94
  %v96 = vpop.f32.mrb[0].mxu0
  %v97 = vpop.f32.mrb[0].mxu0
  %98 = vdwg.mxu0
  %100 = vset.pattern.permute.xlu0 0
  %101 = vperm.xlu0 %100, %v45
  %v102 = vpop.permute.xlu0 %101
  %v104 = vadd.f32 %v102, %v93
  %v105 = vadd.f32 %v102, %v95
  %s106 = scalar_lea.vmem %s1, 4
  %v107 = vld [vmem:[%s106] sm:$0xf]
  %110 = vrot.lane.b32.xlu0 %v43, 126
  %v111 = vpop.permute.xlu0 %110
  %112 = vrot.lane.b32.xlu0 %v44, 126
  %v113 = vpop.permute.xlu0 %112
  %vm114 = vcmask 1031168
  %v115 = vsel %vm114, %v111, %v113
  %v117 = vsel %vm47, %v107, 0
  %v120 = vsel %vm51, %v115, 0
  %v123 = vsel %vm51, %v113, 0
  %125 = vmatprep.subr.bf16.mxu0 %v123
  %126 = vmatpush1.bf16.msra.mxu0 %v120
  %127 = vmatprep.subr.bf16.mxu0 0
  %128 = vmatpush1.bf16.msra.mxu0 0
  %129 = vmatprep.subr.bf16.mxu0 0
  %130 = vmatpush1.bf16.msra.mxu0 0
  %131 = vmatprep.subr.bf16.mxu0 0
  %132 = vmatpush1.bf16.msra.mxu0 0
  %133 = vmatprep.subr.bf16.mxu0 0
  %134 = vmatpush1.bf16.msra.mxu0 0
  %135 = vmatprep.subr.bf16.mxu0 0
  %136 = vmatpush1.bf16.msra.mxu0 0
  %137 = vmatprep.subr.bf16.mxu0 0
  %138 = vmatpush1.bf16.msra.mxu0 0
  %139 = vmatprep.subr.bf16.mxu0 0
  %140 = vmatpush1.bf16.msra.mxu0 0
  %141 = vmatprep.subr.bf16.mxu0 0
  %142 = vmatpush1.bf16.msra.mxu0 0
  %143 = vmatprep.subr.bf16.mxu0 0
  %144 = vmatpush1.bf16.msra.mxu0 0
  %145 = vmatprep.subr.bf16.mxu0 0
  %146 = vmatpush1.bf16.msra.mxu0 0
  %147 = vmatprep.subr.bf16.mxu0 0
  %148 = vmatpush1.bf16.msra.mxu0 0
  %149 = vmatprep.subr.bf16.mxu0 0
  %150 = vmatpush1.bf16.msra.mxu0 0
  %151 = vmatprep.subr.bf16.mxu0 0
  %152 = vmatpush1.bf16.msra.mxu0 0
  %153 = vmatprep.subr.bf16.mxu0 0
  %154 = vmatpush1.bf16.msra.mxu0 0
  %155 = vmatprep.subr.bf16.mxu0 0
  %156 = vmatpush1.bf16.msra.mxu0 0
  %157 = vmatprep.mubr.bf16.mxu0 0
  %158 = vmatmul.mubr.bf16.gmra.mrb[0].mxu0 %v117
  %v159 = vpop.f32.mrb[0].mxu0
  %v160 = vadd.f32 0.0, %v159
  %v161 = vpop.f32.mrb[0].mxu0
  %v162 = vadd.f32 0.0, %v161
  %v163 = vpop.f32.mrb[0].mxu0
  %v164 = vpop.f32.mrb[0].mxu0
  %165 = vdwg.mxu0
  %v166 = vadd.f32 %v104, %v160
  %v167 = vadd.f32 %v105, %v162
  %s168 = scalar_lea.vmem %s1, 8
  %v169 = vld [vmem:[%s168] sm:$0xf]
  %170 = vrot.lane.b32.xlu0 %v43, 124
  %v171 = vpop.permute.xlu0 %170
  %172 = vrot.lane.b32.xlu0 %v44, 124
  %v173 = vpop.permute.xlu0 %172
  %vm174 = vcmask 1014784
  %v175 = vsel %vm174, %v171, %v173
  %v177 = vsel %vm47, %v169, 0
  %v180 = vsel %vm51, %v175, 0
  %v183 = vsel %vm51, %v173, 0
  %185 = vmatprep.subr.bf16.mxu0 %v183
  %186 = vmatpush1.bf16.msra.mxu0 %v180
  %187 = vmatprep.subr.bf16.mxu0 0
  %188 = vmatpush1.bf16.msra.mxu0 0
  %189 = vmatprep.subr.bf16.mxu0 0
  %190 = vmatpush1.bf16.msra.mxu0 0
  %191 = vmatprep.subr.bf16.mxu0 0
  %192 = vmatpush1.bf16.msra.mxu0 0
  %193 = vmatprep.subr.bf16.mxu0 0
  %194 = vmatpush1.bf16.msra.mxu0 0
  %195 = vmatprep.subr.bf16.mxu0 0
  %196 = vmatpush1.bf16.msra.mxu0 0
  %197 = vmatprep.subr.bf16.mxu0 0
  %198 = vmatpush1.bf16.msra.mxu0 0
  %199 = vmatprep.subr.bf16.mxu0 0
  %200 = vmatpush1.bf16.msra.mxu0 0
  %201 = vmatprep.subr.bf16.mxu0 0
  %202 = vmatpush1.bf16.msra.mxu0 0
  %203 = vmatprep.subr.bf16.mxu0 0
  %204 = vmatpush1.bf16.msra.mxu0 0
  %205 = vmatprep.subr.bf16.mxu0 0
  %206 = vmatpush1.bf16.msra.mxu0 0
  %207 = vmatprep.subr.bf16.mxu0 0
  %208 = vmatpush1.bf16.msra.mxu0 0
  %209 = vmatprep.subr.bf16.mxu0 0
  %210 = vmatpush1.bf16.msra.mxu0 0
  %211 = vmatprep.subr.bf16.mxu0 0
  %212 = vmatpush1.bf16.msra.mxu0 0
  %213 = vmatprep.subr.bf16.mxu0 0
  %214 = vmatpush1.bf16.msra.mxu0 0
  %215 = vmatprep.subr.bf16.mxu0 0
  %216 = vmatpush1.bf16.msra.mxu0 0
  %217 = vmatprep.mubr.bf16.mxu0 0
  %218 = vmatmul.mubr.bf16.gmra.mrb[0].mxu0 %v177
  %v219 = vpop.f32.mrb[0].mxu0
  %v220 = vadd.f32 0.0, %v219
  %v221 = vpop.f32.mrb[0].mxu0
  %v222 = vadd.f32 0.0, %v221
  %v223 = vpop.f32.mrb[0].mxu0
  %v224 = vpop.f32.mrb[0].mxu0
  %225 = vdwg.mxu0
  %v226 = vadd.f32 %v166, %v220
  %v227 = vadd.f32 %v167, %v222
  %s228 = scalar_lea.vmem %s1, 12
  %v229 = vld [vmem:[%s228] sm:$0xf]
  %230 = vrot.lane.b32.xlu0 %v43, 122
  %v231 = vpop.permute.xlu0 %230
  %232 = vrot.lane.b32.xlu0 %v44, 122
  %v233 = vpop.permute.xlu0 %232
  %vm234 = vcmask 998400
  %v235 = vsel %vm234, %v231, %v233
  %v237 = vsel %vm47, %v229, 0
  %v240 = vsel %vm51, %v235, 0
  %v243 = vsel %vm51, %v233, 0
  %245 = vmatprep.subr.bf16.mxu0 %v243
  %246 = vmatpush1.bf16.msra.mxu0 %v240
  %247 = vmatprep.subr.bf16.mxu0 0
  %248 = vmatpush1.bf16.msra.mxu0 0
  %249 = vmatprep.subr.bf16.mxu0 0
  %250 = vmatpush1.bf16.msra.mxu0 0
  %251 = vmatprep.subr.bf16.mxu0 0
  %252 = vmatpush1.bf16.msra.mxu0 0
  %253 = vmatprep.subr.bf16.mxu0 0
  %254 = vmatpush1.bf16.msra.mxu0 0
  %255 = vmatprep.subr.bf16.mxu0 0
  %256 = vmatpush1.bf16.msra.mxu0 0
  %257 = vmatprep.subr.bf16.mxu0 0
  %258 = vmatpush1.bf16.msra.mxu0 0
  %259 = vmatprep.subr.bf16.mxu0 0
  %260 = vmatpush1.bf16.msra.mxu0 0
  %261 = vmatprep.subr.bf16.mxu0 0
  %262 = vmatpush1.bf16.msra.mxu0 0
  %263 = vmatprep.subr.bf16.mxu0 0
  %264 = vmatpush1.bf16.msra.mxu0 0
  %265 = vmatprep.subr.bf16.mxu0 0
  %266 = vmatpush1.bf16.msra.mxu0 0
  %267 = vmatprep.subr.bf16.mxu0 0
  %268 = vmatpush1.bf16.msra.mxu0 0
  %269 = vmatprep.subr.bf16.mxu0 0
  %270 = vmatpush1.bf16.msra.mxu0 0
  %271 = vmatprep.subr.bf16.mxu0 0
  %272 = vmatpush1.bf16.msra.mxu0 0
  %273 = vmatprep.subr.bf16.mxu0 0
  %274 = vmatpush1.bf16.msra.mxu0 0
  %275 = vmatprep.subr.bf16.mxu0 0
  %276 = vmatpush1.bf16.msra.mxu0 0
  %277 = vmatprep.mubr.bf16.mxu0 0
  %278 = vmatmul.mubr.bf16.gmra.mrb[0].mxu0 %v237
  %v279 = vpop.f32.mrb[0].mxu0
  %v280 = vadd.f32 0.0, %v279
  %v281 = vpop.f32.mrb[0].mxu0
  %v282 = vadd.f32 0.0, %v281
  %v283 = vpop.f32.mrb[0].mxu0
  %v284 = vpop.f32.mrb[0].mxu0
  %285 = vdwg.mxu0
  %v286 = vadd.f32 %v226, %v280
  %v287 = vadd.f32 %v227, %v282
  %s288 = scalar_lea.vmem %s1, 16
  %v289 = vld [vmem:[%s288] sm:$0xf]
  %290 = vrot.lane.b32.xlu0 %v43, 120
  %v291 = vpop.permute.xlu0 %290
  %292 = vrot.lane.b32.xlu0 %v44, 120
  %v293 = vpop.permute.xlu0 %292
  %vm294 = vcmask 982016
  %v295 = vsel %vm294, %v291, %v293
  %v297 = vsel %vm47, %v289, 0
  %v300 = vsel %vm51, %v295, 0
  %v303 = vsel %vm51, %v293, 0
  %305 = vmatprep.subr.bf16.mxu0 %v303
  %306 = vmatpush1.bf16.msra.mxu0 %v300
  %307 = vmatprep.subr.bf16.mxu0 0
  %308 = vmatpush1.bf16.msra.mxu0 0
  %309 = vmatprep.subr.bf16.mxu0 0
  %310 = vmatpush1.bf16.msra.mxu0 0
  %311 = vmatprep.subr.bf16.mxu0 0
  %312 = vmatpush1.bf16.msra.mxu0 0
  %313 = vmatprep.subr.bf16.mxu0 0
  %314 = vmatpush1.bf16.msra.mxu0 0
  %315 = vmatprep.subr.bf16.mxu0 0
  %316 = vmatpush1.bf16.msra.mxu0 0
  %317 = vmatprep.subr.bf16.mxu0 0
  %318 = vmatpush1.bf16.msra.mxu0 0
  %319 = vmatprep.subr.bf16.mxu0 0
  %320 = vmatpush1.bf16.msra.mxu0 0
  %321 = vmatprep.subr.bf16.mxu0 0
  %322 = vmatpush1.bf16.msra.mxu0 0
  %323 = vmatprep.subr.bf16.mxu0 0
  %324 = vmatpush1.bf16.msra.mxu0 0
  %325 = vmatprep.subr.bf16.mxu0 0
  %326 = vmatpush1.bf16.msra.mxu0 0
  %327 = vmatprep.subr.bf16.mxu0 0
  %328 = vmatpush1.bf16.msra.mxu0 0
  %329 = vmatprep.subr.bf16.mxu0 0
  %330 = vmatpush1.bf16.msra.mxu0 0
  %331 = vmatprep.subr.bf16.mxu0 0
  %332 = vmatpush1.bf16.msra.mxu0 0
  %333 = vmatprep.subr.bf16.mxu0 0
  %334 = vmatpush1.bf16.msra.mxu0 0
  %335 = vmatprep.subr.bf16.mxu0 0
  %336 = vmatpush1.bf16.msra.mxu0 0
  %337 = vmatprep.mubr.bf16.mxu0 0
  %338 = vmatmul.mubr.bf16.gmra.mrb[0].mxu0 %v297
  %v339 = vpop.f32.mrb[0].mxu0
  %v340 = vadd.f32 0.0, %v339
  %v341 = vpop.f32.mrb[0].mxu0
  %v342 = vadd.f32 0.0, %v341
  %v343 = vpop.f32.mrb[0].mxu0
  %v344 = vpop.f32.mrb[0].mxu0
  %345 = vdwg.mxu0
  %v346 = vadd.f32 %v286, %v340
  %v347 = vadd.f32 %v287, %v342
  %350 = vrot.lane.b32.xlu0 %v346, 126
  %v351 = vpop.permute.xlu0 %350
  %352 = vrot.lane.b32.xlu0 %v347, 126
  %v353 = vpop.permute.xlu0 %352
  %vm354 = vcmask 1031168
  %v355 = vsel %vm354, %v351, %v353
  %v358 = vmax.f32 %v346, %v355
  %v359 = vmax.f32 %v347, %v353
  %vm360 = vcmp.gt.f32.partialorder %v358, 0.0
  %vm361 = vcmp.gt.f32.partialorder %v359, 0.0
  %v362 = vmin.f32 %v358, 0.0
  %v363 = vmin.f32 %v359, 0.0
  %v364 = vmul.f32 %v362, 1.442695
  %v365 = vpow.pop %v364
  %v366 = vmul.f32 %v363, 1.442695
  %v367 = vpow.pop %v366
  %v368 = vsub.f32 %v365, 1.0
  %v369 = vsub.f32 %v367, 1.0
  %v370 = vsel %vm360, %v358, %v368
  %v371 = vsel %vm361, %v359, %v369
  %v372 = vpack.c.bf16 %v370, %v370
  %v373 = vpack.c.bf16 %v371, %v371
  %v374 = vld [vmem:[%s4] sm:$0xff]
  %v375 = vld [vmem:[%s4 + $0x8] sm:$0xff]
  %v376 = vld [vmem:[%s3] sm:$0xf]
  %v377 = vld [vmem:[%s3 + $0x4] sm:$0xf]
  %v380 = vunpack.c.l.b16 %v376
  %v381 = vunpack.c.l.b16 %v377
  %v382 = vpack.c.b16 %v381, %v380
  %vm383 = vcmask 64512
  %v385 = vsel %vm383, %v382, 0
  %vm387 = vcmask 1043456
  %v389 = vsel %vm387, %v372, 0
  %v392 = vsel %vm387, %v373, 0
  %394 = vmatprep.subr.bf16.mxu0 %v392
  %395 = vmatpush1.bf16.msra.mxu0 %v389
  %396 = vmatprep.subr.bf16.mxu0 0
  %397 = vmatpush1.bf16.msra.mxu0 0
  %398 = vmatprep.subr.bf16.mxu0 0
  %399 = vmatpush1.bf16.msra.mxu0 0
  %400 = vmatprep.subr.bf16.mxu0 0
  %401 = vmatpush1.bf16.msra.mxu0 0
  %402 = vmatprep.subr.bf16.mxu0 0
  %403 = vmatpush1.bf16.msra.mxu0 0
  %404 = vmatprep.subr.bf16.mxu0 0
  %405 = vmatpush1.bf16.msra.mxu0 0
  %406 = vmatprep.subr.bf16.mxu0 0
  %407 = vmatpush1.bf16.msra.mxu0 0
  %408 = vmatprep.subr.bf16.mxu0 0
  %409 = vmatpush1.bf16.msra.mxu0 0
  %410 = vmatprep.subr.bf16.mxu0 0
  %411 = vmatpush1.bf16.msra.mxu0 0
  %412 = vmatprep.subr.bf16.mxu0 0
  %413 = vmatpush1.bf16.msra.mxu0 0
  %414 = vmatprep.subr.bf16.mxu0 0
  %415 = vmatpush1.bf16.msra.mxu0 0
  %416 = vmatprep.subr.bf16.mxu0 0
  %417 = vmatpush1.bf16.msra.mxu0 0
  %418 = vmatprep.subr.bf16.mxu0 0
  %419 = vmatpush1.bf16.msra.mxu0 0
  %420 = vmatprep.subr.bf16.mxu0 0
  %421 = vmatpush1.bf16.msra.mxu0 0
  %422 = vmatprep.subr.bf16.mxu0 0
  %423 = vmatpush1.bf16.msra.mxu0 0
  %424 = vmatprep.subr.bf16.mxu0 0
  %425 = vmatpush1.bf16.msra.mxu0 0
  %426 = vmatprep.mubr.bf16.mxu0 0
  %427 = vmatmul.mubr.bf16.gmra.mrb[0].mxu0 %v385
  %v428 = vpop.f32.mrb[0].mxu0
  %v429 = vadd.f32 0.0, %v428
  %v430 = vpop.f32.mrb[0].mxu0
  %v431 = vadd.f32 0.0, %v430
  %v432 = vpop.f32.mrb[0].mxu0
  %v433 = vadd.f32 0.0, %v432
  %v434 = vpop.f32.mrb[0].mxu0
  %v435 = vadd.f32 0.0, %v434
  %436 = vdwg.mxu0
  %438 = vset.pattern.permute.xlu0 0
  %439 = vperm.xlu0 %438, %v374
  %v440 = vpop.permute.xlu0 %439
  %443 = vset.pattern.permute.xlu0 0
  %444 = vperm.xlu0 %443, %v375
  %v445 = vpop.permute.xlu0 %444
  %v447 = vadd.f32 %v440, %v429
  %v448 = vadd.f32 %v440, %v431
  %v449 = vadd.f32 %v445, %v433
  %v450 = vadd.f32 %v445, %v435
  %s451 = scalar_lea.vmem %s3, 8
  %v452 = vld [vmem:[%s451] sm:$0xf]
  %v453 = vld [vmem:[%s451 + $0x4] sm:$0xf]
  %v456 = vunpack.c.l.b16 %v452
  %v457 = vunpack.c.l.b16 %v453
  %v458 = vpack.c.b16 %v457, %v456
  %461 = vrot.lane.b32.xlu0 %v372, 124
  %v462 = vpop.permute.xlu0 %461
  %463 = vrot.lane.b32.xlu0 %v373, 124
  %v464 = vpop.permute.xlu0 %463
  %v465 = vsel %vm174, %v462, %v464
  %v467 = vsel %vm383, %v458, 0
  %v470 = vsel %vm387, %v465, 0
  %v473 = vsel %vm387, %v464, 0
  %475 = vmatprep.subr.bf16.mxu0 %v473
  %476 = vmatpush1.bf16.msra.mxu0 %v470
  %477 = vmatprep.subr.bf16.mxu0 0
  %478 = vmatpush1.bf16.msra.mxu0 0
  %479 = vmatprep.subr.bf16.mxu0 0
  %480 = vmatpush1.bf16.msra.mxu0 0
  %481 = vmatprep.subr.bf16.mxu0 0
  %482 = vmatpush1.bf16.msra.mxu0 0
  %483 = vmatprep.subr.bf16.mxu0 0
  %484 = vmatpush1.bf16.msra.mxu0 0
  %485 = vmatprep.subr.bf16.mxu0 0
  %486 = vmatpush1.bf16.msra.mxu0 0
  %487 = vmatprep.subr.bf16.mxu0 0
  %488 = vmatpush1.bf16.msra.mxu0 0
  %489 = vmatprep.subr.bf16.mxu0 0
  %490 = vmatpush1.bf16.msra.mxu0 0
  %491 = vmatprep.subr.bf16.mxu0 0
  %492 = vmatpush1.bf16.msra.mxu0 0
  %493 = vmatprep.subr.bf16.mxu0 0
  %494 = vmatpush1.bf16.msra.mxu0 0
  %495 = vmatprep.subr.bf16.mxu0 0
  %496 = vmatpush1.bf16.msra.mxu0 0
  %497 = vmatprep.subr.bf16.mxu0 0
  %498 = vmatpush1.bf16.msra.mxu0 0
  %499 = vmatprep.subr.bf16.mxu0 0
  %500 = vmatpush1.bf16.msra.mxu0 0
  %501 = vmatprep.subr.bf16.mxu0 0
  %502 = vmatpush1.bf16.msra.mxu0 0
  %503 = vmatprep.subr.bf16.mxu0 0
  %504 = vmatpush1.bf16.msra.mxu0 0
  %505 = vmatprep.subr.bf16.mxu0 0
  %506 = vmatpush1.bf16.msra.mxu0 0
  %507 = vmatprep.mubr.bf16.mxu0 0
  %508 = vmatmul.mubr.bf16.gmra.mrb[0].mxu0 %v467
  %v509 = vpop.f32.mrb[0].mxu0
  %v510 = vadd.f32 0.0, %v509
  %v511 = vpop.f32.mrb[0].mxu0
  %v512 = vadd.f32 0.0, %v511
  %v513 = vpop.f32.mrb[0].mxu0
  %v514 = vadd.f32 0.0, %v513
  %v515 = vpop.f32.mrb[0].mxu0
  %v516 = vadd.f32 0.0, %v515
  %517 = vdwg.mxu0
  %v518 = vadd.f32 %v447, %v510
  %v519 = vadd.f32 %v448, %v512
  %v520 = vadd.f32 %v449, %v514
  %v521 = vadd.f32 %v450, %v516
  %s522 = scalar_lea.vmem %s3, 16
  %v523 = vld [vmem:[%s522] sm:$0xf]
  %v524 = vld [vmem:[%s522 + $0x4] sm:$0xf]
  %v527 = vunpack.c.l.b16 %v523
  %v528 = vunpack.c.l.b16 %v524
  %v529 = vpack.c.b16 %v528, %v527
  %530 = vrot.lane.b32.xlu0 %v372, 120
  %v531 = vpop.permute.xlu0 %530
  %532 = vrot.lane.b32.xlu0 %v373, 120
  %v533 = vpop.permute.xlu0 %532
  %v534 = vsel %vm294, %v531, %v533
  %v536 = vsel %vm383, %v529, 0
  %v539 = vsel %vm387, %v534, 0
  %v542 = vsel %vm387, %v533, 0
  %544 = vmatprep.subr.bf16.mxu0 %v542
  %545 = vmatpush1.bf16.msra.mxu0 %v539
  %546 = vmatprep.subr.bf16.mxu0 0
  %547 = vmatpush1.bf16.msra.mxu0 0
  %548 = vmatprep.subr.bf16.mxu0 0
  %549 = vmatpush1.bf16.msra.mxu0 0
  %550 = vmatprep.subr.bf16.mxu0 0
  %551 = vmatpush1.bf16.msra.mxu0 0
  %552 = vmatprep.subr.bf16.mxu0 0
  %553 = vmatpush1.bf16.msra.mxu0 0
  %554 = vmatprep.subr.bf16.mxu0 0
  %555 = vmatpush1.bf16.msra.mxu0 0
  %556 = vmatprep.subr.bf16.mxu0 0
  %557 = vmatpush1.bf16.msra.mxu0 0
  %558 = vmatprep.subr.bf16.mxu0 0
  %559 = vmatpush1.bf16.msra.mxu0 0
  %560 = vmatprep.subr.bf16.mxu0 0
  %561 = vmatpush1.bf16.msra.mxu0 0
  %562 = vmatprep.subr.bf16.mxu0 0
  %563 = vmatpush1.bf16.msra.mxu0 0
  %564 = vmatprep.subr.bf16.mxu0 0
  %565 = vmatpush1.bf16.msra.mxu0 0
  %566 = vmatprep.subr.bf16.mxu0 0
  %567 = vmatpush1.bf16.msra.mxu0 0
  %568 = vmatprep.subr.bf16.mxu0 0
  %569 = vmatpush1.bf16.msra.mxu0 0
  %570 = vmatprep.subr.bf16.mxu0 0
  %571 = vmatpush1.bf16.msra.mxu0 0
  %572 = vmatprep.subr.bf16.mxu0 0
  %573 = vmatpush1.bf16.msra.mxu0 0
  %574 = vmatprep.subr.bf16.mxu0 0
  %575 = vmatpush1.bf16.msra.mxu0 0
  %576 = vmatprep.mubr.bf16.mxu0 0
  %577 = vmatmul.mubr.bf16.gmra.mrb[0].mxu0 %v536
  %v578 = vpop.f32.mrb[0].mxu0
  %v579 = vadd.f32 0.0, %v578
  %v580 = vpop.f32.mrb[0].mxu0
  %v581 = vadd.f32 0.0, %v580
  %v582 = vpop.f32.mrb[0].mxu0
  %v583 = vadd.f32 0.0, %v582
  %v584 = vpop.f32.mrb[0].mxu0
  %v585 = vadd.f32 0.0, %v584
  %586 = vdwg.mxu0
  %v587 = vadd.f32 %v518, %v579
  %v588 = vadd.f32 %v519, %v581
  %v589 = vadd.f32 %v520, %v583
  %v590 = vadd.f32 %v521, %v585
  %s591 = scalar_lea.vmem %s3, 24
  %v592 = vld [vmem:[%s591] sm:$0xf]
  %v593 = vld [vmem:[%s591 + $0x4] sm:$0xf]
  %v596 = vunpack.c.l.b16 %v592
  %v597 = vunpack.c.l.b16 %v593
  %v598 = vpack.c.b16 %v597, %v596
  %599 = vrot.lane.b32.xlu0 %v372, 116
  %v600 = vpop.permute.xlu0 %599
  %601 = vrot.lane.b32.xlu0 %v373, 116
  %v602 = vpop.permute.xlu0 %601
  %vm603 = vcmask 949248
  %v604 = vsel %vm603, %v600, %v602
  %v606 = vsel %vm383, %v598, 0
  %v609 = vsel %vm387, %v604, 0
  %v612 = vsel %vm387, %v602, 0
  %614 = vmatprep.subr.bf16.mxu0 %v612
  %615 = vmatpush1.bf16.msra.mxu0 %v609
  %616 = vmatprep.subr.bf16.mxu0 0
  %617 = vmatpush1.bf16.msra.mxu0 0
  %618 = vmatprep.subr.bf16.mxu0 0
  %619 = vmatpush1.bf16.msra.mxu0 0
  %620 = vmatprep.subr.bf16.mxu0 0
  %621 = vmatpush1.bf16.msra.mxu0 0
  %622 = vmatprep.subr.bf16.mxu0 0
  %623 = vmatpush1.bf16.msra.mxu0 0
  %624 = vmatprep.subr.bf16.mxu0 0
  %625 = vmatpush1.bf16.msra.mxu0 0
  %626 = vmatprep.subr.bf16.mxu0 0
  %627 = vmatpush1.bf16.msra.mxu0 0
  %628 = vmatprep.subr.bf16.mxu0 0
  %629 = vmatpush1.bf16.msra.mxu0 0
  %630 = vmatprep.subr.bf16.mxu0 0
  %631 = vmatpush1.bf16.msra.mxu0 0
  %632 = vmatprep.subr.bf16.mxu0 0
  %633 = vmatpush1.bf16.msra.mxu0 0
  %634 = vmatprep.subr.bf16.mxu0 0
  %635 = vmatpush1.bf16.msra.mxu0 0
  %636 = vmatprep.subr.bf16.mxu0 0
  %637 = vmatpush1.bf16.msra.mxu0 0
  %638 = vmatprep.subr.bf16.mxu0 0
  %639 = vmatpush1.bf16.msra.mxu0 0
  %640 = vmatprep.subr.bf16.mxu0 0
  %641 = vmatpush1.bf16.msra.mxu0 0
  %642 = vmatprep.subr.bf16.mxu0 0
  %643 = vmatpush1.bf16.msra.mxu0 0
  %644 = vmatprep.subr.bf16.mxu0 0
  %645 = vmatpush1.bf16.msra.mxu0 0
  %646 = vmatprep.mubr.bf16.mxu0 0
  %647 = vmatmul.mubr.bf16.gmra.mrb[0].mxu0 %v606
  %v648 = vpop.f32.mrb[0].mxu0
  %v649 = vadd.f32 0.0, %v648
  %v650 = vpop.f32.mrb[0].mxu0
  %v651 = vadd.f32 0.0, %v650
  %v652 = vpop.f32.mrb[0].mxu0
  %v653 = vadd.f32 0.0, %v652
  %v654 = vpop.f32.mrb[0].mxu0
  %v655 = vadd.f32 0.0, %v654
  %656 = vdwg.mxu0
  %v657 = vadd.f32 %v587, %v649
  %v658 = vadd.f32 %v588, %v651
  %v659 = vadd.f32 %v589, %v653
  %v660 = vadd.f32 %v590, %v655
  %s661 = scalar_lea.vmem %s3, 32
  %v662 = vld [vmem:[%s661] sm:$0xf]
  %v663 = vld [vmem:[%s661 + $0x4] sm:$0xf]
  %v666 = vunpack.c.l.b16 %v662
  %v667 = vunpack.c.l.b16 %v663
  %v668 = vpack.c.b16 %v667, %v666
  %669 = vrot.lane.b32.xlu0 %v372, 112
  %v670 = vpop.permute.xlu0 %669
  %671 = vrot.lane.b32.xlu0 %v373, 112
  %v672 = vpop.permute.xlu0 %671
  %vm673 = vcmask 916480
  %v674 = vsel %vm673, %v670, %v672
  %v676 = vsel %vm383, %v668, 0
  %v679 = vsel %vm387, %v674, 0
  %v682 = vsel %vm387, %v672, 0
  %684 = vmatprep.subr.bf16.mxu0 %v682
  %685 = vmatpush1.bf16.msra.mxu0 %v679
  %686 = vmatprep.subr.bf16.mxu0 0
  %687 = vmatpush1.bf16.msra.mxu0 0
  %688 = vmatprep.subr.bf16.mxu0 0
  %689 = vmatpush1.bf16.msra.mxu0 0
  %690 = vmatprep.subr.bf16.mxu0 0
  %691 = vmatpush1.bf16.msra.mxu0 0
  %692 = vmatprep.subr.bf16.mxu0 0
  %693 = vmatpush1.bf16.msra.mxu0 0
  %694 = vmatprep.subr.bf16.mxu0 0
  %695 = vmatpush1.bf16.msra.mxu0 0
  %696 = vmatprep.subr.bf16.mxu0 0
  %697 = vmatpush1.bf16.msra.mxu0 0
  %698 = vmatprep.subr.bf16.mxu0 0
  %699 = vmatpush1.bf16.msra.mxu0 0
  %700 = vmatprep.subr.bf16.mxu0 0
  %701 = vmatpush1.bf16.msra.mxu0 0
  %702 = vmatprep.subr.bf16.mxu0 0
  %703 = vmatpush1.bf16.msra.mxu0 0
  %704 = vmatprep.subr.bf16.mxu0 0
  %705 = vmatpush1.bf16.msra.mxu0 0
  %706 = vmatprep.subr.bf16.mxu0 0
  %707 = vmatpush1.bf16.msra.mxu0 0
  %708 = vmatprep.subr.bf16.mxu0 0
  %709 = vmatpush1.bf16.msra.mxu0 0
  %710 = vmatprep.subr.bf16.mxu0 0
  %711 = vmatpush1.bf16.msra.mxu0 0
  %712 = vmatprep.subr.bf16.mxu0 0
  %713 = vmatpush1.bf16.msra.mxu0 0
  %714 = vmatprep.subr.bf16.mxu0 0
  %715 = vmatpush1.bf16.msra.mxu0 0
  %716 = vmatprep.mubr.bf16.mxu0 0
  %717 = vmatmul.mubr.bf16.gmra.mrb[0].mxu0 %v676
  %v718 = vpop.f32.mrb[0].mxu0
  %v719 = vadd.f32 0.0, %v718
  %v720 = vpop.f32.mrb[0].mxu0
  %v721 = vadd.f32 0.0, %v720
  %v722 = vpop.f32.mrb[0].mxu0
  %v723 = vadd.f32 0.0, %v722
  %v724 = vpop.f32.mrb[0].mxu0
  %v725 = vadd.f32 0.0, %v724
  %726 = vdwg.mxu0
  %v727 = vadd.f32 %v657, %v719
  %v728 = vadd.f32 %v658, %v721
  %v729 = vadd.f32 %v659, %v723
  %v730 = vadd.f32 %v660, %v725
  %735 = vrot.lane.b32.xlu0 %v727, 124
  %v736 = vpop.permute.xlu0 %735
  %737 = vrot.lane.b32.xlu0 %v728, 124
  %v738 = vpop.permute.xlu0 %737
  %739 = vrot.lane.b32.xlu0 %v729, 124
  %v740 = vpop.permute.xlu0 %739
  %741 = vrot.lane.b32.xlu0 %v730, 124
  %v742 = vpop.permute.xlu0 %741
  %vm743 = vcmask 1014784
  %v744 = vsel %vm743, %v736, %v738
  %v745 = vsel %vm743, %v740, %v742
  %v750 = vmax.f32 %v727, %v744
  %v751 = vmax.f32 %v728, %v738
  %v752 = vmax.f32 %v729, %v745
  %v753 = vmax.f32 %v730, %v742
  %vm754 = vcmp.gt.f32.partialorder %v750, 0.0
  %vm755 = vcmp.gt.f32.partialorder %v751, 0.0
  %vm756 = vcmp.gt.f32.partialorder %v752, 0.0
  %vm757 = vcmp.gt.f32.partialorder %v753, 0.0
  %v758 = vmin.f32 %v750, 0.0
  %v759 = vmin.f32 %v751, 0.0
  %v760 = vmin.f32 %v752, 0.0
  %v761 = vmin.f32 %v753, 0.0
  %v762 = vmul.f32 %v758, 1.442695
  %v763 = vpow.pop %v762
  %v764 = vmul.f32 %v759, 1.442695
  %v765 = vpow.pop %v764
  %v766 = vmul.f32 %v760, 1.442695
  %v767 = vpow.pop %v766
  %v768 = vmul.f32 %v761, 1.442695
  %v769 = vpow.pop %v768
  %v770 = vsub.f32 %v763, 1.0
  %v771 = vsub.f32 %v765, 1.0
  %v772 = vsub.f32 %v767, 1.0
  %v773 = vsub.f32 %v769, 1.0
  %v774 = vsel %vm754, %v750, %v770
  %v775 = vsel %vm755, %v751, %v771
  %v776 = vsel %vm756, %v752, %v772
  %v777 = vsel %vm757, %v753, %v773
  %v778 = vpack.c.bf16 %v776, %v774
  %v779 = vpack.c.bf16 %v777, %v775
  %v780 = vld [vmem:[%s6] sm:$0xff]
  %v781 = vld [vmem:[%s6 + $0x8] sm:$0xff]
  %v782 = vld [vmem:[%s6 + $0x10] sm:$0xff]
  %v783 = vld [vmem:[%s6 + $0x18] sm:$0xff]
  %v784 = vld [vmem:[%s5] sm:$0xf]
  %v785 = vld [vmem:[%s5 + $0x4] sm:$0xf]
  %v786 = vld [vmem:[%s5 + $0x8] sm:$0xf]
  %v787 = vld [vmem:[%s5 + $0xc] sm:$0xf]
  %v792 = vunpack.c.l.b16 %v784
  %v793 = vunpack.c.l.b16 %v785
  %v794 = vunpack.c.l.b16 %v786
  %v795 = vunpack.c.l.b16 %v787
  %v796 = vpack.c.b16 %v793, %v792
  %v797 = vpack.c.b16 %v795, %v794
  %vm798 = vcmask 130048
  %v800 = vsel %vm798, %v796, 0
  %v803 = vsel %vm798, %v797, 0
  %805 = vmatprep.subr.bf16.mxu0 %v779
  %806 = vmatpush1.bf16.msra.mxu0 %v778
  %807 = vmatprep.subr.bf16.mxu0 0
  %808 = vmatpush1.bf16.msra.mxu0 0
  %809 = vmatprep.subr.bf16.mxu0 0
  %810 = vmatpush1.bf16.msra.mxu0 0
  %811 = vmatprep.subr.bf16.mxu0 0
  %812 = vmatpush1.bf16.msra.mxu0 0
  %813 = vmatprep.subr.bf16.mxu0 0
  %814 = vmatpush1.bf16.msra.mxu0 0
  %815 = vmatprep.subr.bf16.mxu0 0
  %816 = vmatpush1.bf16.msra.mxu0 0
  %817 = vmatprep.subr.bf16.mxu0 0
  %818 = vmatpush1.bf16.msra.mxu0 0
  %819 = vmatprep.subr.bf16.mxu0 0
  %820 = vmatpush1.bf16.msra.mxu0 0
  %821 = vmatprep.subr.bf16.mxu0 0
  %822 = vmatpush1.bf16.msra.mxu0 0
  %823 = vmatprep.subr.bf16.mxu0 0
  %824 = vmatpush1.bf16.msra.mxu0 0
  %825 = vmatprep.subr.bf16.mxu0 0
  %826 = vmatpush1.bf16.msra.mxu0 0
  %827 = vmatprep.subr.bf16.mxu0 0
  %828 = vmatpush1.bf16.msra.mxu0 0
  %829 = vmatprep.subr.bf16.mxu0 0
  %830 = vmatpush1.bf16.msra.mxu0 0
  %831 = vmatprep.subr.bf16.mxu0 0
  %832 = vmatpush1.bf16.msra.mxu0 0
  %833 = vmatprep.subr.bf16.mxu0 0
  %834 = vmatpush1.bf16.msra.mxu0 0
  %835 = vmatprep.subr.bf16.mxu0 0
  %836 = vmatpush1.bf16.msra.mxu0 0
  %837 = vmatprep.mubr.bf16.mxu0 0
  %838 = vmatmul.mubr.bf16.gmra.mrb[0].mxu0 %v800
  %v839 = vpop.f32.mrb[0].mxu0
  %v840 = vadd.f32 0.0, %v839
  %v841 = vpop.f32.mrb[0].mxu0
  %v842 = vadd.f32 0.0, %v841
  %v843 = vpop.f32.mrb[0].mxu0
  %v844 = vadd.f32 0.0, %v843
  %v845 = vpop.f32.mrb[0].mxu0
  %v846 = vadd.f32 0.0, %v845
  %847 = vmatprep.mubr.bf16.mxu0 0
  %848 = vmatmul.mubr.bf16.gmra.mrb[0].mxu0 %v803
  %v849 = vpop.f32.mrb[0].mxu0
  %v850 = vadd.f32 0.0, %v849
  %v851 = vpop.f32.mrb[0].mxu0
  %v852 = vadd.f32 0.0, %v851
  %v853 = vpop.f32.mrb[0].mxu0
  %v854 = vadd.f32 0.0, %v853
  %v855 = vpop.f32.mrb[0].mxu0
  %v856 = vadd.f32 0.0, %v855
  %857 = vdwg.mxu0
  %859 = vset.pattern.permute.xlu0 0
  %860 = vperm.xlu0 %859, %v780
  %v861 = vpop.permute.xlu0 %860
  %864 = vset.pattern.permute.xlu0 0
  %865 = vperm.xlu0 %864, %v781
  %v866 = vpop.permute.xlu0 %865
  %869 = vset.pattern.permute.xlu0 0
  %870 = vperm.xlu0 %869, %v782
  %v871 = vpop.permute.xlu0 %870
  %874 = vset.pattern.permute.xlu0 0
  %875 = vperm.xlu0 %874, %v783
  %v876 = vpop.permute.xlu0 %875
  %v878 = vadd.f32 %v861, %v840
  %v879 = vadd.f32 %v861, %v842
  %v880 = vadd.f32 %v866, %v844
  %v881 = vadd.f32 %v866, %v846
  %v882 = vadd.f32 %v871, %v850
  %v883 = vadd.f32 %v871, %v852
  %v884 = vadd.f32 %v876, %v854
  %v885 = vadd.f32 %v876, %v856
  %s886 = scalar_lea.vmem %s5, 16
  %v887 = vld [vmem:[%s886] sm:$0xf]
  %v888 = vld [vmem:[%s886 + $0x4] sm:$0xf]
  %v889 = vld [vmem:[%s886 + $0x8] sm:$0xf]
  %v890 = vld [vmem:[%s886 + $0xc] sm:$0xf]
  %v895 = vunpack.c.l.b16 %v887
  %v896 = vunpack.c.l.b16 %v888
  %v897 = vunpack.c.l.b16 %v889
  %v898 = vunpack.c.l.b16 %v890
  %v899 = vpack.c.b16 %v896, %v895
  %v900 = vpack.c.b16 %v898, %v897
  %903 = vrot.lane.b32.xlu0 %v778, 120
  %v904 = vpop.permute.xlu0 %903
  %905 = vrot.lane.b32.xlu0 %v779, 120
  %v906 = vpop.permute.xlu0 %905
  %v907 = vsel %vm294, %v904, %v906
  %v911 = vsel %vm798, %v899, 0
  %v914 = vsel %vm798, %v900, 0
  %916 = vmatprep.subr.bf16.mxu0 %v906
  %917 = vmatpush1.bf16.msra.mxu0 %v907
  %918 = vmatprep.subr.bf16.mxu0 0
  %919 = vmatpush1.bf16.msra.mxu0 0
  %920 = vmatprep.subr.bf16.mxu0 0
  %921 = vmatpush1.bf16.msra.mxu0 0
  %922 = vmatprep.subr.bf16.mxu0 0
  %923 = vmatpush1.bf16.msra.mxu0 0
  %924 = vmatprep.subr.bf16.mxu0 0
  %925 = vmatpush1.bf16.msra.mxu0 0
  %926 = vmatprep.subr.bf16.mxu0 0
  %927 = vmatpush1.bf16.msra.mxu0 0
  %928 = vmatprep.subr.bf16.mxu0 0
  %929 = vmatpush1.bf16.msra.mxu0 0
  %930 = vmatprep.subr.bf16.mxu0 0
  %931 = vmatpush1.bf16.msra.mxu0 0
  %932 = vmatprep.subr.bf16.mxu0 0
  %933 = vmatpush1.bf16.msra.mxu0 0
  %934 = vmatprep.subr.bf16.mxu0 0
  %935 = vmatpush1.bf16.msra.mxu0 0
  %936 = vmatprep.subr.bf16.mxu0 0
  %937 = vmatpush1.bf16.msra.mxu0 0
  %938 = vmatprep.subr.bf16.mxu0 0
  %939 = vmatpush1.bf16.msra.mxu0 0
  %940 = vmatprep.subr.bf16.mxu0 0
  %941 = vmatpush1.bf16.msra.mxu0 0
  %942 = vmatprep.subr.bf16.mxu0 0
  %943 = vmatpush1.bf16.msra.mxu0 0
  %944 = vmatprep.subr.bf16.mxu0 0
  %945 = vmatpush1.bf16.msra.mxu0 0
  %946 = vmatprep.subr.bf16.mxu0 0
  %947 = vmatpush1.bf16.msra.mxu0 0
  %948 = vmatprep.mubr.bf16.mxu0 0
  %949 = vmatmul.mubr.bf16.gmra.mrb[0].mxu0 %v911
  %v950 = vpop.f32.mrb[0].mxu0
  %v951 = vadd.f32 0.0, %v950
  %v952 = vpop.f32.mrb[0].mxu0
  %v953 = vadd.f32 0.0, %v952
  %v954 = vpop.f32.mrb[0].mxu0
  %v955 = vadd.f32 0.0, %v954
  %v956 = vpop.f32.mrb[0].mxu0
  %v957 = vadd.f32 0.0, %v956
  %958 = vmatprep.mubr.bf16.mxu0 0
  %959 = vmatmul.mubr.bf16.gmra.mrb[0].mxu0 %v914
  %v960 = vpop.f32.mrb[0].mxu0
  %v961 = vadd.f32 0.0, %v960
  %v962 = vpop.f32.mrb[0].mxu0
  %v963 = vadd.f32 0.0, %v962
  %v964 = vpop.f32.mrb[0].mxu0
  %v965 = vadd.f32 0.0, %v964
  %v966 = vpop.f32.mrb[0].mxu0
  %v967 = vadd.f32 0.0, %v966
  %968 = vdwg.mxu0
  %v969 = vadd.f32 %v878, %v951
  %v970 = vadd.f32 %v879, %v953
  %v971 = vadd.f32 %v880, %v955
  %v972 = vadd.f32 %v881, %v957
  %v973 = vadd.f32 %v882, %v961
  %v974 = vadd.f32 %v883, %v963
  %v975 = vadd.f32 %v884, %v965
  %v976 = vadd.f32 %v885, %v967
  %s977 = scalar_lea.vmem %s5, 32
  %v978 = vld [vmem:[%s977] sm:$0xf]
  %v979 = vld [vmem:[%s977 + $0x4] sm:$0xf]
  %v980 = vld [vmem:[%s977 + $0x8] sm:$0xf]
  %v981 = vld [vmem:[%s977 + $0xc] sm:$0xf]
  %v986 = vunpack.c.l.b16 %v978
  %v987 = vunpack.c.l.b16 %v979
  %v988 = vunpack.c.l.b16 %v980
  %v989 = vunpack.c.l.b16 %v981
  %v990 = vpack.c.b16 %v987, %v986
  %v991 = vpack.c.b16 %v989, %v988
  %992 = vrot.lane.b32.xlu0 %v778, 112
  %v993 = vpop.permute.xlu0 %992
  %994 = vrot.lane.b32.xlu0 %v779, 112
  %v995 = vpop.permute.xlu0 %994
  %v996 = vsel %vm673, %v993, %v995
  %v1000 = vsel %vm798, %v990, 0
  %v1003 = vsel %vm798, %v991, 0
  %1005 = vmatprep.subr.bf16.mxu0 %v995
  %1006 = vmatpush1.bf16.msra.mxu0 %v996
  %1007 = vmatprep.subr.bf16.mxu0 0
  %1008 = vmatpush1.bf16.msra.mxu0 0
  %1009 = vmatprep.subr.bf16.mxu0 0
  %1010 = vmatpush1.bf16.msra.mxu0 0
  %1011 = vmatprep.subr.bf16.mxu0 0
  %1012 = vmatpush1.bf16.msra.mxu0 0
  %1013 = vmatprep.subr.bf16.mxu0 0
  %1014 = vmatpush1.bf16.msra.mxu0 0
  %1015 = vmatprep.subr.bf16.mxu0 0
  %1016 = vmatpush1.bf16.msra.mxu0 0
  %1017 = vmatprep.subr.bf16.mxu0 0
  %1018 = vmatpush1.bf16.msra.mxu0 0
  %1019 = vmatprep.subr.bf16.mxu0 0
  %1020 = vmatpush1.bf16.msra.mxu0 0
  %1021 = vmatprep.subr.bf16.mxu0 0
  %1022 = vmatpush1.bf16.msra.mxu0 0
  %1023 = vmatprep.subr.bf16.mxu0 0
  %1024 = vmatpush1.bf16.msra.mxu0 0
  %1025 = vmatprep.subr.bf16.mxu0 0
  %1026 = vmatpush1.bf16.msra.mxu0 0
  %1027 = vmatprep.subr.bf16.mxu0 0
  %1028 = vmatpush1.bf16.msra.mxu0 0
  %1029 = vmatprep.subr.bf16.mxu0 0
  %1030 = vmatpush1.bf16.msra.mxu0 0
  %1031 = vmatprep.subr.bf16.mxu0 0
  %1032 = vmatpush1.bf16.msra.mxu0 0
  %1033 = vmatprep.subr.bf16.mxu0 0
  %1034 = vmatpush1.bf16.msra.mxu0 0
  %1035 = vmatprep.subr.bf16.mxu0 0
  %1036 = vmatpush1.bf16.msra.mxu0 0
  %1037 = vmatprep.mubr.bf16.mxu0 0
  %1038 = vmatmul.mubr.bf16.gmra.mrb[0].mxu0 %v1000
  %v1039 = vpop.f32.mrb[0].mxu0
  %v1040 = vadd.f32 0.0, %v1039
  %v1041 = vpop.f32.mrb[0].mxu0
  %v1042 = vadd.f32 0.0, %v1041
  %v1043 = vpop.f32.mrb[0].mxu0
  %v1044 = vadd.f32 0.0, %v1043
  %v1045 = vpop.f32.mrb[0].mxu0
  %v1046 = vadd.f32 0.0, %v1045
  %1047 = vmatprep.mubr.bf16.mxu0 0
  %1048 = vmatmul.mubr.bf16.gmra.mrb[0].mxu0 %v1003
  %v1049 = vpop.f32.mrb[0].mxu0
  %v1050 = vadd.f32 0.0, %v1049
  %v1051 = vpop.f32.mrb[0].mxu0
  %v1052 = vadd.f32 0.0, %v1051
  %v1053 = vpop.f32.mrb[0].mxu0
  %v1054 = vadd.f32 0.0, %v1053
  %v1055 = vpop.f32.mrb[0].mxu0
  %v1056 = vadd.f32 0.0, %v1055
  %1057 = vdwg.mxu0
  %v1058 = vadd.f32 %v969, %v1040
  %v1059 = vadd.f32 %v970, %v1042
  %v1060 = vadd.f32 %v971, %v1044
  %v1061 = vadd.f32 %v972, %v1046
  %v1062 = vadd.f32 %v973, %v1050
  %v1063 = vadd.f32 %v974, %v1052
  %v1064 = vadd.f32 %v975, %v1054
  %v1065 = vadd.f32 %v976, %v1056
  %s1066 = scalar_lea.vmem %s5, 48
  %v1067 = vld [vmem:[%s1066] sm:$0xf]
  %v1068 = vld [vmem:[%s1066 + $0x4] sm:$0xf]
  %v1069 = vld [vmem:[%s1066 + $0x8] sm:$0xf]
  %v1070 = vld [vmem:[%s1066 + $0xc] sm:$0xf]
  %v1075 = vunpack.c.l.b16 %v1067
  %v1076 = vunpack.c.l.b16 %v1068
  %v1077 = vunpack.c.l.b16 %v1069
  %v1078 = vunpack.c.l.b16 %v1070
  %v1079 = vpack.c.b16 %v1076, %v1075
  %v1080 = vpack.c.b16 %v1078, %v1077
  %1081 = vrot.lane.b32.xlu0 %v778, 104
  %v1082 = vpop.permute.xlu0 %1081
  %1083 = vrot.lane.b32.xlu0 %v779, 104
  %v1084 = vpop.permute.xlu0 %1083
  %vm1085 = vcmask 850944
  %v1086 = vsel %vm1085, %v1082, %v1084
  %v1090 = vsel %vm798, %v1079, 0
  %v1093 = vsel %vm798, %v1080, 0
  %1095 = vmatprep.subr.bf16.mxu0 %v1084
  %1096 = vmatpush1.bf16.msra.mxu0 %v1086
  %1097 = vmatprep.subr.bf16.mxu0 0
  %1098 = vmatpush1.bf16.msra.mxu0 0
  %1099 = vmatprep.subr.bf16.mxu0 0
  %1100 = vmatpush1.bf16.msra.mxu0 0
  %1101 = vmatprep.subr.bf16.mxu0 0
  %1102 = vmatpush1.bf16.msra.mxu0 0
  %1103 = vmatprep.subr.bf16.mxu0 0
  %1104 = vmatpush1.bf16.msra.mxu0 0
  %1105 = vmatprep.subr.bf16.mxu0 0
  %1106 = vmatpush1.bf16.msra.mxu0 0
  %1107 = vmatprep.subr.bf16.mxu0 0
  %1108 = vmatpush1.bf16.msra.mxu0 0
  %1109 = vmatprep.subr.bf16.mxu0 0
  %1110 = vmatpush1.bf16.msra.mxu0 0
  %1111 = vmatprep.subr.bf16.mxu0 0
  %1112 = vmatpush1.bf16.msra.mxu0 0
  %1113 = vmatprep.subr.bf16.mxu0 0
  %1114 = vmatpush1.bf16.msra.mxu0 0
  %1115 = vmatprep.subr.bf16.mxu0 0
  %1116 = vmatpush1.bf16.msra.mxu0 0
  %1117 = vmatprep.subr.bf16.mxu0 0
  %1118 = vmatpush1.bf16.msra.mxu0 0
  %1119 = vmatprep.subr.bf16.mxu0 0
  %1120 = vmatpush1.bf16.msra.mxu0 0
  %1121 = vmatprep.subr.bf16.mxu0 0
  %1122 = vmatpush1.bf16.msra.mxu0 0
  %1123 = vmatprep.subr.bf16.mxu0 0
  %1124 = vmatpush1.bf16.msra.mxu0 0
  %1125 = vmatprep.subr.bf16.mxu0 0
  %1126 = vmatpush1.bf16.msra.mxu0 0
  %1127 = vmatprep.mubr.bf16.mxu0 0
  %1128 = vmatmul.mubr.bf16.gmra.mrb[0].mxu0 %v1090
  %v1129 = vpop.f32.mrb[0].mxu0
  %v1130 = vadd.f32 0.0, %v1129
  %v1131 = vpop.f32.mrb[0].mxu0
  %v1132 = vadd.f32 0.0, %v1131
  %v1133 = vpop.f32.mrb[0].mxu0
  %v1134 = vadd.f32 0.0, %v1133
  %v1135 = vpop.f32.mrb[0].mxu0
  %v1136 = vadd.f32 0.0, %v1135
  %1137 = vmatprep.mubr.bf16.mxu0 0
  %1138 = vmatmul.mubr.bf16.gmra.mrb[0].mxu0 %v1093
  %v1139 = vpop.f32.mrb[0].mxu0
  %v1140 = vadd.f32 0.0, %v1139
  %v1141 = vpop.f32.mrb[0].mxu0
  %v1142 = vadd.f32 0.0, %v1141
  %v1143 = vpop.f32.mrb[0].mxu0
  %v1144 = vadd.f32 0.0, %v1143
  %v1145 = vpop.f32.mrb[0].mxu0
  %v1146 = vadd.f32 0.0, %v1145
  %1147 = vdwg.mxu0
  %v1148 = vadd.f32 %v1058, %v1130
  %v1149 = vadd.f32 %v1059, %v1132
  %v1150 = vadd.f32 %v1060, %v1134
  %v1151 = vadd.f32 %v1061, %v1136
  %v1152 = vadd.f32 %v1062, %v1140
  %v1153 = vadd.f32 %v1063, %v1142
  %v1154 = vadd.f32 %v1064, %v1144
  %v1155 = vadd.f32 %v1065, %v1146
  %s1156 = scalar_lea.vmem %s5, 64
  %v1157 = vld [vmem:[%s1156] sm:$0xf]
  %v1158 = vld [vmem:[%s1156 + $0x4] sm:$0xf]
  %v1159 = vld [vmem:[%s1156 + $0x8] sm:$0xf]
  %v1160 = vld [vmem:[%s1156 + $0xc] sm:$0xf]
  %v1165 = vunpack.c.l.b16 %v1157
  %v1166 = vunpack.c.l.b16 %v1158
  %v1167 = vunpack.c.l.b16 %v1159
  %v1168 = vunpack.c.l.b16 %v1160
  %v1169 = vpack.c.b16 %v1166, %v1165
  %v1170 = vpack.c.b16 %v1168, %v1167
  %1171 = vrot.lane.b32.xlu0 %v778, 96
  %v1172 = vpop.permute.xlu0 %1171
  %1173 = vrot.lane.b32.xlu0 %v779, 96
  %v1174 = vpop.permute.xlu0 %1173
  %vm1175 = vcmask 785408
  %v1176 = vsel %vm1175, %v1172, %v1174
  %v1180 = vsel %vm798, %v1169, 0
  %v1183 = vsel %vm798, %v1170, 0
  %1185 = vmatprep.subr.bf16.mxu0 %v1174
  %1186 = vmatpush1.bf16.msra.mxu0 %v1176
  %1187 = vmatprep.subr.bf16.mxu0 0
  %1188 = vmatpush1.bf16.msra.mxu0 0
  %1189 = vmatprep.subr.bf16.mxu0 0
  %1190 = vmatpush1.bf16.msra.mxu0 0
  %1191 = vmatprep.subr.bf16.mxu0 0
  %1192 = vmatpush1.bf16.msra.mxu0 0
  %1193 = vmatprep.subr.bf16.mxu0 0
  %1194 = vmatpush1.bf16.msra.mxu0 0
  %1195 = vmatprep.subr.bf16.mxu0 0
  %1196 = vmatpush1.bf16.msra.mxu0 0
  %1197 = vmatprep.subr.bf16.mxu0 0
  %1198 = vmatpush1.bf16.msra.mxu0 0
  %1199 = vmatprep.subr.bf16.mxu0 0
  %1200 = vmatpush1.bf16.msra.mxu0 0
  %1201 = vmatprep.subr.bf16.mxu0 0
  %1202 = vmatpush1.bf16.msra.mxu0 0
  %1203 = vmatprep.subr.bf16.mxu0 0
  %1204 = vmatpush1.bf16.msra.mxu0 0
  %1205 = vmatprep.subr.bf16.mxu0 0
  %1206 = vmatpush1.bf16.msra.mxu0 0
  %1207 = vmatprep.subr.bf16.mxu0 0
  %1208 = vmatpush1.bf16.msra.mxu0 0
  %1209 = vmatprep.subr.bf16.mxu0 0
  %1210 = vmatpush1.bf16.msra.mxu0 0
  %1211 = vmatprep.subr.bf16.mxu0 0
  %1212 = vmatpush1.bf16.msra.mxu0 0
  %1213 = vmatprep.subr.bf16.mxu0 0
  %1214 = vmatpush1.bf16.msra.mxu0 0
  %1215 = vmatprep.subr.bf16.mxu0 0
  %1216 = vmatpush1.bf16.msra.mxu0 0
  %1217 = vmatprep.mubr.bf16.mxu0 0
  %1218 = vmatmul.mubr.bf16.gmra.mrb[0].mxu0 %v1180
  %v1219 = vpop.f32.mrb[0].mxu0
  %v1220 = vadd.f32 0.0, %v1219
  %v1221 = vpop.f32.mrb[0].mxu0
  %v1222 = vadd.f32 0.0, %v1221
  %v1223 = vpop.f32.mrb[0].mxu0
  %v1224 = vadd.f32 0.0, %v1223
  %v1225 = vpop.f32.mrb[0].mxu0
  %v1226 = vadd.f32 0.0, %v1225
  %1227 = vmatprep.mubr.bf16.mxu0 0
  %1228 = vmatmul.mubr.bf16.gmra.mrb[0].mxu0 %v1183
  %v1229 = vpop.f32.mrb[0].mxu0
  %v1230 = vadd.f32 0.0, %v1229
  %v1231 = vpop.f32.mrb[0].mxu0
  %v1232 = vadd.f32 0.0, %v1231
  %v1233 = vpop.f32.mrb[0].mxu0
  %v1234 = vadd.f32 0.0, %v1233
  %v1235 = vpop.f32.mrb[0].mxu0
  %v1236 = vadd.f32 0.0, %v1235
  %1237 = vdwg.mxu0
  %v1238 = vadd.f32 %v1148, %v1220
  %v1239 = vadd.f32 %v1149, %v1222
  %v1240 = vadd.f32 %v1150, %v1224
  %v1241 = vadd.f32 %v1151, %v1226
  %v1242 = vadd.f32 %v1152, %v1230
  %v1243 = vadd.f32 %v1153, %v1232
  %v1244 = vadd.f32 %v1154, %v1234
  %v1245 = vadd.f32 %v1155, %v1236
  %1254 = vrot.lane.b32.xlu0 %v1238, 120
  %v1255 = vpop.permute.xlu0 %1254
  %1256 = vrot.lane.b32.xlu0 %v1239, 120
  %v1257 = vpop.permute.xlu0 %1256
  %1258 = vrot.lane.b32.xlu0 %v1240, 120
  %v1259 = vpop.permute.xlu0 %1258
  %1260 = vrot.lane.b32.xlu0 %v1241, 120
  %v1261 = vpop.permute.xlu0 %1260
  %1262 = vrot.lane.b32.xlu0 %v1242, 120
  %v1263 = vpop.permute.xlu0 %1262
  %1264 = vrot.lane.b32.xlu0 %v1243, 120
  %v1265 = vpop.permute.xlu0 %1264
  %1266 = vrot.lane.b32.xlu0 %v1244, 120
  %v1267 = vpop.permute.xlu0 %1266
  %1268 = vrot.lane.b32.xlu0 %v1245, 120
  %v1269 = vpop.permute.xlu0 %1268
  %vm1270 = vcmask 982016
  %v1271 = vsel %vm1270, %v1255, %v1257
  %v1272 = vsel %vm1270, %v1259, %v1261
  %v1273 = vsel %vm1270, %v1263, %v1265
  %v1274 = vsel %vm1270, %v1267, %v1269
  %v1283 = vmax.f32 %v1238, %v1271
  %v1284 = vmax.f32 %v1239, %v1257
  %v1285 = vmax.f32 %v1240, %v1272
  %v1286 = vmax.f32 %v1241, %v1261
  %v1287 = vmax.f32 %v1242, %v1273
  %v1288 = vmax.f32 %v1243, %v1265
  %v1289 = vmax.f32 %v1244, %v1274
  %v1290 = vmax.f32 %v1245, %v1269
  %vm1291 = vcmp.gt.f32.partialorder %v1283, 0.0
  %vm1292 = vcmp.gt.f32.partialorder %v1284, 0.0
  %vm1293 = vcmp.gt.f32.partialorder %v1285, 0.0
  %vm1294 = vcmp.gt.f32.partialorder %v1286, 0.0
  %vm1295 = vcmp.gt.f32.partialorder %v1287, 0.0
  %vm1296 = vcmp.gt.f32.partialorder %v1288, 0.0
  %vm1297 = vcmp.gt.f32.partialorder %v1289, 0.0
  %vm1298 = vcmp.gt.f32.partialorder %v1290, 0.0
  %v1299 = vmin.f32 %v1283, 0.0
  %v1300 = vmin.f32 %v1284, 0.0
  %v1301 = vmin.f32 %v1285, 0.0
  %v1302 = vmin.f32 %v1286, 0.0
  %v1303 = vmin.f32 %v1287, 0.0
  %v1304 = vmin.f32 %v1288, 0.0
  %v1305 = vmin.f32 %v1289, 0.0
  %v1306 = vmin.f32 %v1290, 0.0
  %v1307 = vmul.f32 %v1299, 1.442695
  %v1308 = vpow.pop %v1307
  %v1309 = vmul.f32 %v1300, 1.442695
  %v1310 = vpow.pop %v1309
  %v1311 = vmul.f32 %v1301, 1.442695
  %v1312 = vpow.pop %v1311
  %v1313 = vmul.f32 %v1302, 1.442695
  %v1314 = vpow.pop %v1313
  %v1315 = vmul.f32 %v1303, 1.442695
  %v1316 = vpow.pop %v1315
  %v1317 = vmul.f32 %v1304, 1.442695
  %v1318 = vpow.pop %v1317
  %v1319 = vmul.f32 %v1305, 1.442695
  %v1320 = vpow.pop %v1319
  %v1321 = vmul.f32 %v1306, 1.442695
  %v1322 = vpow.pop %v1321
  %v1323 = vsub.f32 %v1308, 1.0
  %v1324 = vsub.f32 %v1310, 1.0
  %v1325 = vsub.f32 %v1312, 1.0
  %v1326 = vsub.f32 %v1314, 1.0
  %v1327 = vsub.f32 %v1316, 1.0
  %v1328 = vsub.f32 %v1318, 1.0
  %v1329 = vsub.f32 %v1320, 1.0
  %v1330 = vsub.f32 %v1322, 1.0
  %v1331 = vsel %vm1291, %v1283, %v1323
  %v1332 = vsel %vm1292, %v1284, %v1324
  %v1333 = vsel %vm1293, %v1285, %v1325
  %v1334 = vsel %vm1294, %v1286, %v1326
  %v1335 = vsel %vm1295, %v1287, %v1327
  %v1336 = vsel %vm1296, %v1288, %v1328
  %v1337 = vsel %vm1297, %v1289, %v1329
  %v1338 = vsel %vm1298, %v1290, %v1330
  %v1339 = vpack.c.bf16 %v1333, %v1331
  %v1340 = vpack.c.bf16 %v1334, %v1332
  %v1341 = vpack.c.bf16 %v1337, %v1335
  %v1342 = vpack.c.bf16 %v1338, %v1336
  %v1343 = vld [vmem:[%s8] sm:$0xff]
  %v1344 = vld [vmem:[%s8 + $0x8] sm:$0xff]
  %v1345 = vld [vmem:[%s8 + $0x10] sm:$0xff]
  %v1346 = vld [vmem:[%s8 + $0x18] sm:$0xff]
  %v1347 = vld [vmem:[%s8 + $0x20] sm:$0xff]
  %v1348 = vld [vmem:[%s8 + $0x28] sm:$0xff]
  %v1349 = vld [vmem:[%s8 + $0x30] sm:$0xff]
  %v1350 = vld [vmem:[%s8 + $0x38] sm:$0xff]
  %v1351 = vld [vmem:[%s7] sm:$0xf]
  %v1352 = vld [vmem:[%s7 + $0x4] sm:$0xf]
  %v1353 = vld [vmem:[%s7 + $0x8] sm:$0xf]
  %v1354 = vld [vmem:[%s7 + $0xc] sm:$0xf]
  %v1355 = vld [vmem:[%s7 + $0x10] sm:$0xf]
  %v1356 = vld [vmem:[%s7 + $0x14] sm:$0xf]
  %v1357 = vld [vmem:[%s7 + $0x18] sm:$0xf]
  %v1358 = vld [vmem:[%s7 + $0x1c] sm:$0xf]
  %v1367 = vunpack.c.l.b16 %v1351
  %v1368 = vunpack.c.l.b16 %v1352
  %v1369 = vunpack.c.l.b16 %v1353
  %v1370 = vunpack.c.l.b16 %v1354
  %v1371 = vunpack.c.l.b16 %v1355
  %v1372 = vunpack.c.l.b16 %v1356
  %v1373 = vunpack.c.l.b16 %v1357
  %v1374 = vunpack.c.l.b16 %v1358
  %v1375 = vpack.c.b16 %v1368, %v1367
  %v1376 = vpack.c.b16 %v1370, %v1369
  %v1377 = vpack.c.b16 %v1372, %v1371
  %v1378 = vpack.c.b16 %v1374, %v1373
  %vm1379 = vcmask 261120
  %v1381 = vsel %vm1379, %v1375, 0
  %v1384 = vsel %vm1379, %v1376, 0
  %v1387 = vsel %vm1379, %v1377, 0
  %v1390 = vsel %vm1379, %v1378, 0
  %1392 = vmatprep.subr.bf16.mxu0 0
  %1393 = vmatpush1.bf16.msra.mxu0 %v1339
  %1394 = vmatprep.subr.bf16.mxu0 0
  %1395 = vmatpush1.bf16.msra.mxu0 %v1341
  %1396 = vmatprep.subr.bf16.mxu0 0
  %1397 = vmatpush1.bf16.msra.mxu0 0
  %1398 = vmatprep.subr.bf16.mxu0 0
  %1399 = vmatpush1.bf16.msra.mxu0 0
  %1400 = vmatprep.subr.bf16.mxu0 0
  %1401 = vmatpush1.bf16.msra.mxu0 0
  %1402 = vmatprep.subr.bf16.mxu0 0
  %1403 = vmatpush1.bf16.msra.mxu0 0
  %1404 = vmatprep.subr.bf16.mxu0 0
  %1405 = vmatpush1.bf16.msra.mxu0 0
  %1406 = vmatprep.subr.bf16.mxu0 0
  %1407 = vmatpush1.bf16.msra.mxu0 0
  %1408 = vmatprep.subr.bf16.mxu0 0
  %1409 = vmatpush1.bf16.msra.mxu0 0
  %1410 = vmatprep.subr.bf16.mxu0 0
  %1411 = vmatpush1.bf16.msra.mxu0 0
  %1412 = vmatprep.subr.bf16.mxu0 0
  %1413 = vmatpush1.bf16.msra.mxu0 0
  %1414 = vmatprep.subr.bf16.mxu0 0
  %1415 = vmatpush1.bf16.msra.mxu0 0
  %1416 = vmatprep.subr.bf16.mxu0 0
  %1417 = vmatpush1.bf16.msra.mxu0 0
  %1418 = vmatprep.subr.bf16.mxu0 0
  %1419 = vmatpush1.bf16.msra.mxu0 0
  %1420 = vmatprep.subr.bf16.mxu0 0
  %1421 = vmatpush1.bf16.msra.mxu0 0
  %1422 = vmatprep.subr.bf16.mxu0 0
  %1423 = vmatpush1.bf16.msra.mxu0 0
  %1424 = vmatprep.mubr.bf16.mxu0 0
  %1425 = vmatmul.mubr.bf16.gmra.mrb[0].mxu0 %v1381
  %v1426 = vpop.f32.mrb[0].mxu0
  %v1427 = vadd.f32 0.0, %v1426
  %v1428 = vpop.f32.mrb[0].mxu0
  %v1429 = vpop.f32.mrb[0].mxu0
  %v1430 = vadd.f32 0.0, %v1429
  %v1431 = vpop.f32.mrb[0].mxu0
  %1432 = vmatprep.mubr.bf16.mxu0 0
  %1433 = vmatmul.mubr.bf16.gmra.mrb[0].mxu0 %v1384
  %v1434 = vpop.f32.mrb[0].mxu0
  %v1435 = vadd.f32 0.0, %v1434
  %v1436 = vpop.f32.mrb[0].mxu0
  %v1437 = vpop.f32.mrb[0].mxu0
  %v1438 = vadd.f32 0.0, %v1437
  %v1439 = vpop.f32.mrb[0].mxu0
  %1440 = vmatprep.mubr.bf16.mxu0 0
  %1441 = vmatmul.mubr.bf16.gmra.mrb[0].mxu0 %v1387
  %v1442 = vpop.f32.mrb[0].mxu0
  %v1443 = vadd.f32 0.0, %v1442
  %v1444 = vpop.f32.mrb[0].mxu0
  %v1445 = vpop.f32.mrb[0].mxu0
  %v1446 = vadd.f32 0.0, %v1445
  %v1447 = vpop.f32.mrb[0].mxu0
  %1448 = vmatprep.mubr.bf16.mxu0 0
  %1449 = vmatmul.mubr.bf16.gmra.mrb[0].mxu0 %v1390
  %v1450 = vpop.f32.mrb[0].mxu0
  %v1451 = vadd.f32 0.0, %v1450
  %v1452 = vpop.f32.mrb[0].mxu0
  %v1453 = vpop.f32.mrb[0].mxu0
  %v1454 = vadd.f32 0.0, %v1453
  %v1455 = vpop.f32.mrb[0].mxu0
  %1456 = vdwg.mxu0
  %1458 = vset.pattern.permute.xlu0 0
  %1459 = vperm.xlu0 %1458, %v1343
  %v1460 = vpop.permute.xlu0 %1459
  %1463 = vset.pattern.permute.xlu0 0
  %1464 = vperm.xlu0 %1463, %v1344
  %v1465 = vpop.permute.xlu0 %1464
  %1468 = vset.pattern.permute.xlu0 0
  %1469 = vperm.xlu0 %1468, %v1345
  %v1470 = vpop.permute.xlu0 %1469
  %1473 = vset.pattern.permute.xlu0 0
  %1474 = vperm.xlu0 %1473, %v1346
  %v1475 = vpop.permute.xlu0 %1474
  %1478 = vset.pattern.permute.xlu0 0
  %1479 = vperm.xlu0 %1478, %v1347
  %v1480 = vpop.permute.xlu0 %1479
  %1483 = vset.pattern.permute.xlu0 0
  %1484 = vperm.xlu0 %1483, %v1348
  %v1485 = vpop.permute.xlu0 %1484
  %1488 = vset.pattern.permute.xlu0 0
  %1489 = vperm.xlu0 %1488, %v1349
  %v1490 = vpop.permute.xlu0 %1489
  %1493 = vset.pattern.permute.xlu0 0
  %1494 = vperm.xlu0 %1493, %v1350
  %v1495 = vpop.permute.xlu0 %1494
  %v1497 = vadd.f32 %v1460, %v1427
  %v1498 = vadd.f32 %v1465, %v1430
  %v1499 = vadd.f32 %v1470, %v1435
  %v1500 = vadd.f32 %v1475, %v1438
  %v1501 = vadd.f32 %v1480, %v1443
  %v1502 = vadd.f32 %v1485, %v1446
  %v1503 = vadd.f32 %v1490, %v1451
  %v1504 = vadd.f32 %v1495, %v1454
  %s1505 = scalar_lea.vmem %s7, 32
  %v1506 = vld [vmem:[%s1505] sm:$0xf]
  %v1507 = vld [vmem:[%s1505 + $0x4] sm:$0xf]
  %v1508 = vld [vmem:[%s1505 + $0x8] sm:$0xf]
  %v1509 = vld [vmem:[%s1505 + $0xc] sm:$0xf]
  %v1510 = vld [vmem:[%s1505 + $0x10] sm:$0xf]
  %v1511 = vld [vmem:[%s1505 + $0x14] sm:$0xf]
  %v1512 = vld [vmem:[%s1505 + $0x18] sm:$0xf]
  %v1513 = vld [vmem:[%s1505 + $0x1c] sm:$0xf]
  %v1522 = vunpack.c.l.b16 %v1506
  %v1523 = vunpack.c.l.b16 %v1507
  %v1524 = vunpack.c.l.b16 %v1508
  %v1525 = vunpack.c.l.b16 %v1509
  %v1526 = vunpack.c.l.b16 %v1510
  %v1527 = vunpack.c.l.b16 %v1511
  %v1528 = vunpack.c.l.b16 %v1512
  %v1529 = vunpack.c.l.b16 %v1513
  %v1530 = vpack.c.b16 %v1523, %v1522
  %v1531 = vpack.c.b16 %v1525, %v1524
  %v1532 = vpack.c.b16 %v1527, %v1526
  %v1533 = vpack.c.b16 %v1529, %v1528
  %1538 = vrot.lane.b32.xlu0 %v1339, 112
  %v1539 = vpop.permute.xlu0 %1538
  %1540 = vrot.lane.b32.xlu0 %v1340, 112
  %v1541 = vpop.permute.xlu0 %1540
  %1542 = vrot.lane.b32.xlu0 %v1341, 112
  %v1543 = vpop.permute.xlu0 %1542
  %1544 = vrot.lane.b32.xlu0 %v1342, 112
  %v1545 = vpop.permute.xlu0 %1544
  %v1546 = vsel %vm673, %v1539, %v1541
  %v1547 = vsel %vm673, %v1543, %v1545
  %v1551 = vsel %vm1379, %v1530, 0
  %v1554 = vsel %vm1379, %v1531, 0
  %v1557 = vsel %vm1379, %v1532, 0
  %v1560 = vsel %vm1379, %v1533, 0
  %1562 = vmatprep.subr.bf16.mxu0 0
  %1563 = vmatpush1.bf16.msra.mxu0 %v1546
  %1564 = vmatprep.subr.bf16.mxu0 0
  %1565 = vmatpush1.bf16.msra.mxu0 %v1547
  %1566 = vmatprep.subr.bf16.mxu0 0
  %1567 = vmatpush1.bf16.msra.mxu0 0
  %1568 = vmatprep.subr.bf16.mxu0 0
  %1569 = vmatpush1.bf16.msra.mxu0 0
  %1570 = vmatprep.subr.bf16.mxu0 0
  %1571 = vmatpush1.bf16.msra.mxu0 0
  %1572 = vmatprep.subr.bf16.mxu0 0
  %1573 = vmatpush1.bf16.msra.mxu0 0
  %1574 = vmatprep.subr.bf16.mxu0 0
  %1575 = vmatpush1.bf16.msra.mxu0 0
  %1576 = vmatprep.subr.bf16.mxu0 0
  %1577 = vmatpush1.bf16.msra.mxu0 0
  %1578 = vmatprep.subr.bf16.mxu0 0
  %1579 = vmatpush1.bf16.msra.mxu0 0
  %1580 = vmatprep.subr.bf16.mxu0 0
  %1581 = vmatpush1.bf16.msra.mxu0 0
  %1582 = vmatprep.subr.bf16.mxu0 0
  %1583 = vmatpush1.bf16.msra.mxu0 0
  %1584 = vmatprep.subr.bf16.mxu0 0
  %1585 = vmatpush1.bf16.msra.mxu0 0
  %1586 = vmatprep.subr.bf16.mxu0 0
  %1587 = vmatpush1.bf16.msra.mxu0 0
  %1588 = vmatprep.subr.bf16.mxu0 0
  %1589 = vmatpush1.bf16.msra.mxu0 0
  %1590 = vmatprep.subr.bf16.mxu0 0
  %1591 = vmatpush1.bf16.msra.mxu0 0
  %1592 = vmatprep.subr.bf16.mxu0 0
  %1593 = vmatpush1.bf16.msra.mxu0 0
  %1594 = vmatprep.mubr.bf16.mxu0 0
  %1595 = vmatmul.mubr.bf16.gmra.mrb[0].mxu0 %v1551
  %v1596 = vpop.f32.mrb[0].mxu0
  %v1597 = vadd.f32 0.0, %v1596
  %v1598 = vpop.f32.mrb[0].mxu0
  %v1599 = vpop.f32.mrb[0].mxu0
  %v1600 = vadd.f32 0.0, %v1599
  %v1601 = vpop.f32.mrb[0].mxu0
  %1602 = vmatprep.mubr.bf16.mxu0 0
  %1603 = vmatmul.mubr.bf16.gmra.mrb[0].mxu0 %v1554
  %v1604 = vpop.f32.mrb[0].mxu0
  %v1605 = vadd.f32 0.0, %v1604
  %v1606 = vpop.f32.mrb[0].mxu0
  %v1607 = vpop.f32.mrb[0].mxu0
  %v1608 = vadd.f32 0.0, %v1607
  %v1609 = vpop.f32.mrb[0].mxu0
  %1610 = vmatprep.mubr.bf16.mxu0 0
  %1611 = vmatmul.mubr.bf16.gmra.mrb[0].mxu0 %v1557
  %v1612 = vpop.f32.mrb[0].mxu0
  %v1613 = vadd.f32 0.0, %v1612
  %v1614 = vpop.f32.mrb[0].mxu0
  %v1615 = vpop.f32.mrb[0].mxu0
  %v1616 = vadd.f32 0.0, %v1615
  %v1617 = vpop.f32.mrb[0].mxu0
  %1618 = vmatprep.mubr.bf16.mxu0 0
  %1619 = vmatmul.mubr.bf16.gmra.mrb[0].mxu0 %v1560
  %v1620 = vpop.f32.mrb[0].mxu0
  %v1621 = vadd.f32 0.0, %v1620
  %v1622 = vpop.f32.mrb[0].mxu0
  %v1623 = vpop.f32.mrb[0].mxu0
  %v1624 = vadd.f32 0.0, %v1623
  %v1625 = vpop.f32.mrb[0].mxu0
  %1626 = vdwg.mxu0
  %v1627 = vadd.f32 %v1497, %v1597
  %v1628 = vadd.f32 %v1498, %v1600
  %v1629 = vadd.f32 %v1499, %v1605
  %v1630 = vadd.f32 %v1500, %v1608
  %v1631 = vadd.f32 %v1501, %v1613
  %v1632 = vadd.f32 %v1502, %v1616
  %v1633 = vadd.f32 %v1503, %v1621
  %v1634 = vadd.f32 %v1504, %v1624
  %s1635 = scalar_lea.vmem %s7, 64
  %v1636 = vld [vmem:[%s1635] sm:$0xf]
  %v1637 = vld [vmem:[%s1635 + $0x4] sm:$0xf]
  %v1638 = vld [vmem:[%s1635 + $0x8] sm:$0xf]
  %v1639 = vld [vmem:[%s1635 + $0xc] sm:$0xf]
  %v1640 = vld [vmem:[%s1635 + $0x10] sm:$0xf]
  %v1641 = vld [vmem:[%s1635 + $0x14] sm:$0xf]
  %v1642 = vld [vmem:[%s1635 + $0x18] sm:$0xf]
  %v1643 = vld [vmem:[%s1635 + $0x1c] sm:$0xf]
  %v1652 = vunpack.c.l.b16 %v1636
  %v1653 = vunpack.c.l.b16 %v1637
  %v1654 = vunpack.c.l.b16 %v1638
  %v1655 = vunpack.c.l.b16 %v1639
  %v1656 = vunpack.c.l.b16 %v1640
  %v1657 = vunpack.c.l.b16 %v1641
  %v1658 = vunpack.c.l.b16 %v1642
  %v1659 = vunpack.c.l.b16 %v1643
  %v1660 = vpack.c.b16 %v1653, %v1652
  %v1661 = vpack.c.b16 %v1655, %v1654
  %v1662 = vpack.c.b16 %v1657, %v1656
  %v1663 = vpack.c.b16 %v1659, %v1658
  %1664 = vrot.lane.b32.xlu0 %v1339, 96
  %v1665 = vpop.permute.xlu0 %1664
  %1666 = vrot.lane.b32.xlu0 %v1340, 96
  %v1667 = vpop.permute.xlu0 %1666
  %1668 = vrot.lane.b32.xlu0 %v1341, 96
  %v1669 = vpop.permute.xlu0 %1668
  %1670 = vrot.lane.b32.xlu0 %v1342, 96
  %v1671 = vpop.permute.xlu0 %1670
  %v1672 = vsel %vm1175, %v1665, %v1667
  %v1673 = vsel %vm1175, %v1669, %v1671
  %v1677 = vsel %vm1379, %v1660, 0
  %v1680 = vsel %vm1379, %v1661, 0
  %v1683 = vsel %vm1379, %v1662, 0
  %v1686 = vsel %vm1379, %v1663, 0
  %1688 = vmatprep.subr.bf16.mxu0 0
  %1689 = vmatpush1.bf16.msra.mxu0 %v1672
  %1690 = vmatprep.subr.bf16.mxu0 0
  %1691 = vmatpush1.bf16.msra.mxu0 %v1673
  %1692 = vmatprep.subr.bf16.mxu0 0
  %1693 = vmatpush1.bf16.msra.mxu0 0
  %1694 = vmatprep.subr.bf16.mxu0 0
  %1695 = vmatpush1.bf16.msra.mxu0 0
  %1696 = vmatprep.subr.bf16.mxu0 0
  %1697 = vmatpush1.bf16.msra.mxu0 0
  %1698 = vmatprep.subr.bf16.mxu0 0
  %1699 = vmatpush1.bf16.msra.mxu0 0
  %1700 = vmatprep.subr.bf16.mxu0 0
  %1701 = vmatpush1.bf16.msra.mxu0 0
  %1702 = vmatprep.subr.bf16.mxu0 0
  %1703 = vmatpush1.bf16.msra.mxu0 0
  %1704 = vmatprep.subr.bf16.mxu0 0
  %1705 = vmatpush1.bf16.msra.mxu0 0
  %1706 = vmatprep.subr.bf16.mxu0 0
  %1707 = vmatpush1.bf16.msra.mxu0 0
  %1708 = vmatprep.subr.bf16.mxu0 0
  %1709 = vmatpush1.bf16.msra.mxu0 0
  %1710 = vmatprep.subr.bf16.mxu0 0
  %1711 = vmatpush1.bf16.msra.mxu0 0
  %1712 = vmatprep.subr.bf16.mxu0 0
  %1713 = vmatpush1.bf16.msra.mxu0 0
  %1714 = vmatprep.subr.bf16.mxu0 0
  %1715 = vmatpush1.bf16.msra.mxu0 0
  %1716 = vmatprep.subr.bf16.mxu0 0
  %1717 = vmatpush1.bf16.msra.mxu0 0
  %1718 = vmatprep.subr.bf16.mxu0 0
  %1719 = vmatpush1.bf16.msra.mxu0 0
  %1720 = vmatprep.mubr.bf16.mxu0 0
  %1721 = vmatmul.mubr.bf16.gmra.mrb[0].mxu0 %v1677
  %v1722 = vpop.f32.mrb[0].mxu0
  %v1723 = vadd.f32 0.0, %v1722
  %v1724 = vpop.f32.mrb[0].mxu0
  %v1725 = vpop.f32.mrb[0].mxu0
  %v1726 = vadd.f32 0.0, %v1725
  %v1727 = vpop.f32.mrb[0].mxu0
  %1728 = vmatprep.mubr.bf16.mxu0 0
  %1729 = vmatmul.mubr.bf16.gmra.mrb[0].mxu0 %v1680
  %v1730 = vpop.f32.mrb[0].mxu0
  %v1731 = vadd.f32 0.0, %v1730
  %v1732 = vpop.f32.mrb[0].mxu0
  %v1733 = vpop.f32.mrb[0].mxu0
  %v1734 = vadd.f32 0.0, %v1733
  %v1735 = vpop.f32.mrb[0].mxu0
  %1736 = vmatprep.mubr.bf16.mxu0 0
  %1737 = vmatmul.mubr.bf16.gmra.mrb[0].mxu0 %v1683
  %v1738 = vpop.f32.mrb[0].mxu0
  %v1739 = vadd.f32 0.0, %v1738
  %v1740 = vpop.f32.mrb[0].mxu0
  %v1741 = vpop.f32.mrb[0].mxu0
  %v1742 = vadd.f32 0.0, %v1741
  %v1743 = vpop.f32.mrb[0].mxu0
  %1744 = vmatprep.mubr.bf16.mxu0 0
  %1745 = vmatmul.mubr.bf16.gmra.mrb[0].mxu0 %v1686
  %v1746 = vpop.f32.mrb[0].mxu0
  %v1747 = vadd.f32 0.0, %v1746
  %v1748 = vpop.f32.mrb[0].mxu0
  %v1749 = vpop.f32.mrb[0].mxu0
  %v1750 = vadd.f32 0.0, %v1749
  %v1751 = vpop.f32.mrb[0].mxu0
  %1752 = vdwg.mxu0
  %v1753 = vadd.f32 %v1627, %v1723
  %v1754 = vadd.f32 %v1628, %v1726
  %v1755 = vadd.f32 %v1629, %v1731
  %v1756 = vadd.f32 %v1630, %v1734
  %v1757 = vadd.f32 %v1631, %v1739
  %v1758 = vadd.f32 %v1632, %v1742
  %v1759 = vadd.f32 %v1633, %v1747
  %v1760 = vadd.f32 %v1634, %v1750
  %s1761 = scalar_lea.vmem %s7, 96
  %v1762 = vld [vmem:[%s1761] sm:$0xf]
  %v1763 = vld [vmem:[%s1761 + $0x4] sm:$0xf]
  %v1764 = vld [vmem:[%s1761 + $0x8] sm:$0xf]
  %v1765 = vld [vmem:[%s1761 + $0xc] sm:$0xf]
  %v1766 = vld [vmem:[%s1761 + $0x10] sm:$0xf]
  %v1767 = vld [vmem:[%s1761 + $0x14] sm:$0xf]
  %v1768 = vld [vmem:[%s1761 + $0x18] sm:$0xf]
  %v1769 = vld [vmem:[%s1761 + $0x1c] sm:$0xf]
  %v1778 = vunpack.c.l.b16 %v1762
  %v1779 = vunpack.c.l.b16 %v1763
  %v1780 = vunpack.c.l.b16 %v1764
  %v1781 = vunpack.c.l.b16 %v1765
  %v1782 = vunpack.c.l.b16 %v1766
  %v1783 = vunpack.c.l.b16 %v1767
  %v1784 = vunpack.c.l.b16 %v1768
  %v1785 = vunpack.c.l.b16 %v1769
  %v1786 = vpack.c.b16 %v1779, %v1778
  %v1787 = vpack.c.b16 %v1781, %v1780
  %v1788 = vpack.c.b16 %v1783, %v1782
  %v1789 = vpack.c.b16 %v1785, %v1784
  %1790 = vrot.lane.b32.xlu0 %v1339, 80
  %v1791 = vpop.permute.xlu0 %1790
  %1792 = vrot.lane.b32.xlu0 %v1340, 80
  %v1793 = vpop.permute.xlu0 %1792
  %1794 = vrot.lane.b32.xlu0 %v1341, 80
  %v1795 = vpop.permute.xlu0 %1794
  %1796 = vrot.lane.b32.xlu0 %v1342, 80
  %v1797 = vpop.permute.xlu0 %1796
  %vm1798 = vcmask 654336
  %v1799 = vsel %vm1798, %v1791, %v1793
  %v1800 = vsel %vm1798, %v1795, %v1797
  %v1804 = vsel %vm1379, %v1786, 0
  %v1807 = vsel %vm1379, %v1787, 0
  %v1810 = vsel %vm1379, %v1788, 0
  %v1813 = vsel %vm1379, %v1789, 0
  %1815 = vmatprep.subr.bf16.mxu0 0
  %1816 = vmatpush1.bf16.msra.mxu0 %v1799
  %1817 = vmatprep.subr.bf16.mxu0 0
  %1818 = vmatpush1.bf16.msra.mxu0 %v1800
  %1819 = vmatprep.subr.bf16.mxu0 0
  %1820 = vmatpush1.bf16.msra.mxu0 0
  %1821 = vmatprep.subr.bf16.mxu0 0
  %1822 = vmatpush1.bf16.msra.mxu0 0
  %1823 = vmatprep.subr.bf16.mxu0 0
  %1824 = vmatpush1.bf16.msra.mxu0 0
  %1825 = vmatprep.subr.bf16.mxu0 0
  %1826 = vmatpush1.bf16.msra.mxu0 0
  %1827 = vmatprep.subr.bf16.mxu0 0
  %1828 = vmatpush1.bf16.msra.mxu0 0
  %1829 = vmatprep.subr.bf16.mxu0 0
  %1830 = vmatpush1.bf16.msra.mxu0 0
  %1831 = vmatprep.subr.bf16.mxu0 0
  %1832 = vmatpush1.bf16.msra.mxu0 0
  %1833 = vmatprep.subr.bf16.mxu0 0
  %1834 = vmatpush1.bf16.msra.mxu0 0
  %1835 = vmatprep.subr.bf16.mxu0 0
  %1836 = vmatpush1.bf16.msra.mxu0 0
  %1837 = vmatprep.subr.bf16.mxu0 0
  %1838 = vmatpush1.bf16.msra.mxu0 0
  %1839 = vmatprep.subr.bf16.mxu0 0
  %1840 = vmatpush1.bf16.msra.mxu0 0
  %1841 = vmatprep.subr.bf16.mxu0 0
  %1842 = vmatpush1.bf16.msra.mxu0 0
  %1843 = vmatprep.subr.bf16.mxu0 0
  %1844 = vmatpush1.bf16.msra.mxu0 0
  %1845 = vmatprep.subr.bf16.mxu0 0
  %1846 = vmatpush1.bf16.msra.mxu0 0
  %1847 = vmatprep.mubr.bf16.mxu0 0
  %1848 = vmatmul.mubr.bf16.gmra.mrb[0].mxu0 %v1804
  %v1849 = vpop.f32.mrb[0].mxu0
  %v1850 = vadd.f32 0.0, %v1849
  %v1851 = vpop.f32.mrb[0].mxu0
  %v1852 = vpop.f32.mrb[0].mxu0
  %v1853 = vadd.f32 0.0, %v1852
  %v1854 = vpop.f32.mrb[0].mxu0
  %1855 = vmatprep.mubr.bf16.mxu0 0
  %1856 = vmatmul.mubr.bf16.gmra.mrb[0].mxu0 %v1807
  %v1857 = vpop.f32.mrb[0].mxu0
  %v1858 = vadd.f32 0.0, %v1857
  %v1859 = vpop.f32.mrb[0].mxu0
  %v1860 = vpop.f32.mrb[0].mxu0
  %v1861 = vadd.f32 0.0, %v1860
  %v1862 = vpop.f32.mrb[0].mxu0
  %1863 = vmatprep.mubr.bf16.mxu0 0
  %1864 = vmatmul.mubr.bf16.gmra.mrb[0].mxu0 %v1810
  %v1865 = vpop.f32.mrb[0].mxu0
  %v1866 = vadd.f32 0.0, %v1865
  %v1867 = vpop.f32.mrb[0].mxu0
  %v1868 = vpop.f32.mrb[0].mxu0
  %v1869 = vadd.f32 0.0, %v1868
  %v1870 = vpop.f32.mrb[0].mxu0
  %1871 = vmatprep.mubr.bf16.mxu0 0
  %1872 = vmatmul.mubr.bf16.gmra.mrb[0].mxu0 %v1813
  %v1873 = vpop.f32.mrb[0].mxu0
  %v1874 = vadd.f32 0.0, %v1873
  %v1875 = vpop.f32.mrb[0].mxu0
  %v1876 = vpop.f32.mrb[0].mxu0
  %v1877 = vadd.f32 0.0, %v1876
  %v1878 = vpop.f32.mrb[0].mxu0
  %1879 = vdwg.mxu0
  %v1880 = vadd.f32 %v1753, %v1850
  %v1881 = vadd.f32 %v1754, %v1853
  %v1882 = vadd.f32 %v1755, %v1858
  %v1883 = vadd.f32 %v1756, %v1861
  %v1884 = vadd.f32 %v1757, %v1866
  %v1885 = vadd.f32 %v1758, %v1869
  %v1886 = vadd.f32 %v1759, %v1874
  %v1887 = vadd.f32 %v1760, %v1877
  %s1888 = scalar_lea.vmem %s7, 128
  %v1889 = vld [vmem:[%s1888] sm:$0xf]
  %v1890 = vld [vmem:[%s1888 + $0x4] sm:$0xf]
  %v1891 = vld [vmem:[%s1888 + $0x8] sm:$0xf]
  %v1892 = vld [vmem:[%s1888 + $0xc] sm:$0xf]
  %v1893 = vld [vmem:[%s1888 + $0x10] sm:$0xf]
  %v1894 = vld [vmem:[%s1888 + $0x14] sm:$0xf]
  %v1895 = vld [vmem:[%s1888 + $0x18] sm:$0xf]
  %v1896 = vld [vmem:[%s1888 + $0x1c] sm:$0xf]
  %v1905 = vunpack.c.l.b16 %v1889
  %v1906 = vunpack.c.l.b16 %v1890
  %v1907 = vunpack.c.l.b16 %v1891
  %v1908 = vunpack.c.l.b16 %v1892
  %v1909 = vunpack.c.l.b16 %v1893
  %v1910 = vunpack.c.l.b16 %v1894
  %v1911 = vunpack.c.l.b16 %v1895
  %v1912 = vunpack.c.l.b16 %v1896
  %v1913 = vpack.c.b16 %v1906, %v1905
  %v1914 = vpack.c.b16 %v1908, %v1907
  %v1915 = vpack.c.b16 %v1910, %v1909
  %v1916 = vpack.c.b16 %v1912, %v1911
  %1917 = vrot.lane.b32.xlu0 %v1339, 64
  %v1918 = vpop.permute.xlu0 %1917
  %1919 = vrot.lane.b32.xlu0 %v1340, 64
  %v1920 = vpop.permute.xlu0 %1919
  %1921 = vrot.lane.b32.xlu0 %v1341, 64
  %v1922 = vpop.permute.xlu0 %1921
  %1923 = vrot.lane.b32.xlu0 %v1342, 64
  %v1924 = vpop.permute.xlu0 %1923
  %vm1925 = vcmask 523264
  %v1926 = vsel %vm1925, %v1918, %v1920
  %v1927 = vsel %vm1925, %v1922, %v1924
  %v1931 = vsel %vm1379, %v1913, 0
  %v1934 = vsel %vm1379, %v1914, 0
  %v1937 = vsel %vm1379, %v1915, 0
  %v1940 = vsel %vm1379, %v1916, 0
  %1942 = vmatprep.subr.bf16.mxu0 0
  %1943 = vmatpush1.bf16.msra.mxu0 %v1926
  %1944 = vmatprep.subr.bf16.mxu0 0
  %1945 = vmatpush1.bf16.msra.mxu0 %v1927
  %1946 = vmatprep.subr.bf16.mxu0 0
  %1947 = vmatpush1.bf16.msra.mxu0 0
  %1948 = vmatprep.subr.bf16.mxu0 0
  %1949 = vmatpush1.bf16.msra.mxu0 0
  %1950 = vmatprep.subr.bf16.mxu0 0
  %1951 = vmatpush1.bf16.msra.mxu0 0
  %1952 = vmatprep.subr.bf16.mxu0 0
  %1953 = vmatpush1.bf16.msra.mxu0 0
  %1954 = vmatprep.subr.bf16.mxu0 0
  %1955 = vmatpush1.bf16.msra.mxu0 0
  %1956 = vmatprep.subr.bf16.mxu0 0
  %1957 = vmatpush1.bf16.msra.mxu0 0
  %1958 = vmatprep.subr.bf16.mxu0 0
  %1959 = vmatpush1.bf16.msra.mxu0 0
  %1960 = vmatprep.subr.bf16.mxu0 0
  %1961 = vmatpush1.bf16.msra.mxu0 0
  %1962 = vmatprep.subr.bf16.mxu0 0
  %1963 = vmatpush1.bf16.msra.mxu0 0
  %1964 = vmatprep.subr.bf16.mxu0 0
  %1965 = vmatpush1.bf16.msra.mxu0 0
  %1966 = vmatprep.subr.bf16.mxu0 0
  %1967 = vmatpush1.bf16.msra.mxu0 0
  %1968 = vmatprep.subr.bf16.mxu0 0
  %1969 = vmatpush1.bf16.msra.mxu0 0
  %1970 = vmatprep.subr.bf16.mxu0 0
  %1971 = vmatpush1.bf16.msra.mxu0 0
  %1972 = vmatprep.subr.bf16.mxu0 0
  %1973 = vmatpush1.bf16.msra.mxu0 0
  %1974 = vmatprep.mubr.bf16.mxu0 0
  %1975 = vmatmul.mubr.bf16.gmra.mrb[0].mxu0 %v1931
  %v1976 = vpop.f32.mrb[0].mxu0
  %v1977 = vadd.f32 0.0, %v1976
  %v1978 = vpop.f32.mrb[0].mxu0
  %v1979 = vpop.f32.mrb[0].mxu0
  %v1980 = vadd.f32 0.0, %v1979
  %v1981 = vpop.f32.mrb[0].mxu0
  %1982 = vmatprep.mubr.bf16.mxu0 0
  %1983 = vmatmul.mubr.bf16.gmra.mrb[0].mxu0 %v1934
  %v1984 = vpop.f32.mrb[0].mxu0
  %v1985 = vadd.f32 0.0, %v1984
  %v1986 = vpop.f32.mrb[0].mxu0
  %v1987 = vpop.f32.mrb[0].mxu0
  %v1988 = vadd.f32 0.0, %v1987
  %v1989 = vpop.f32.mrb[0].mxu0
  %1990 = vmatprep.mubr.bf16.mxu0 0
  %1991 = vmatmul.mubr.bf16.gmra.mrb[0].mxu0 %v1937
  %v1992 = vpop.f32.mrb[0].mxu0
  %v1993 = vadd.f32 0.0, %v1992
  %v1994 = vpop.f32.mrb[0].mxu0
  %v1995 = vpop.f32.mrb[0].mxu0
  %v1996 = vadd.f32 0.0, %v1995
  %v1997 = vpop.f32.mrb[0].mxu0
  %1998 = vmatprep.mubr.bf16.mxu0 0
  %1999 = vmatmul.mubr.bf16.gmra.mrb[0].mxu0 %v1940
  %v2000 = vpop.f32.mrb[0].mxu0
  %v2001 = vadd.f32 0.0, %v2000
  %v2002 = vpop.f32.mrb[0].mxu0
  %v2003 = vpop.f32.mrb[0].mxu0
  %v2004 = vadd.f32 0.0, %v2003
  %v2005 = vpop.f32.mrb[0].mxu0
  %2006 = vdwg.mxu0
  %v2007 = vadd.f32 %v1880, %v1977
  %v2008 = vadd.f32 %v1881, %v1980
  %v2009 = vadd.f32 %v1882, %v1985
  %v2010 = vadd.f32 %v1883, %v1988
  %v2011 = vadd.f32 %v1884, %v1993
  %v2012 = vadd.f32 %v1885, %v1996
  %v2013 = vadd.f32 %v1886, %v2001
  %v2014 = vadd.f32 %v1887, %v2004
  %2023 = vrot.lane.b32.xlu0 %v2007, 112
  %v2024 = vpop.permute.xlu0 %2023
  %2025 = vrot.lane.b32.xlu0 %v2008, 112
  %v2026 = vpop.permute.xlu0 %2025
  %2027 = vrot.lane.b32.xlu0 %v2009, 112
  %v2028 = vpop.permute.xlu0 %2027
  %2029 = vrot.lane.b32.xlu0 %v2010, 112
  %v2030 = vpop.permute.xlu0 %2029
  %2031 = vrot.lane.b32.xlu0 %v2011, 112
  %v2032 = vpop.permute.xlu0 %2031
  %2033 = vrot.lane.b32.xlu0 %v2012, 112
  %v2034 = vpop.permute.xlu0 %2033
  %2035 = vrot.lane.b32.xlu0 %v2013, 112
  %v2036 = vpop.permute.xlu0 %2035
  %2037 = vrot.lane.b32.xlu0 %v2014, 112
  %v2038 = vpop.permute.xlu0 %2037
  %v2047 = vmax.f32 %v2007, %v2024
  %v2048 = vmax.f32 %v2008, %v2026
  %v2049 = vmax.f32 %v2009, %v2028
  %v2050 = vmax.f32 %v2010, %v2030
  %v2051 = vmax.f32 %v2011, %v2032
  %v2052 = vmax.f32 %v2012, %v2034
  %v2053 = vmax.f32 %v2013, %v2036
  %v2054 = vmax.f32 %v2014, %v2038
  %vm2055 = vcmp.gt.f32.partialorder %v2047, 0.0
  %vm2056 = vcmp.gt.f32.partialorder %v2048, 0.0
  %vm2057 = vcmp.gt.f32.partialorder %v2049, 0.0
  %vm2058 = vcmp.gt.f32.partialorder %v2050, 0.0
  %vm2059 = vcmp.gt.f32.partialorder %v2051, 0.0
  %vm2060 = vcmp.gt.f32.partialorder %v2052, 0.0
  %vm2061 = vcmp.gt.f32.partialorder %v2053, 0.0
  %vm2062 = vcmp.gt.f32.partialorder %v2054, 0.0
  %v2063 = vmin.f32 %v2047, 0.0
  %v2064 = vmin.f32 %v2048, 0.0
  %v2065 = vmin.f32 %v2049, 0.0
  %v2066 = vmin.f32 %v2050, 0.0
  %v2067 = vmin.f32 %v2051, 0.0
  %v2068 = vmin.f32 %v2052, 0.0
  %v2069 = vmin.f32 %v2053, 0.0
  %v2070 = vmin.f32 %v2054, 0.0
  %v2071 = vmul.f32 %v2063, 1.442695
  %v2072 = vpow.pop %v2071
  %v2073 = vmul.f32 %v2064, 1.442695
  %v2074 = vpow.pop %v2073
  %v2075 = vmul.f32 %v2065, 1.442695
  %v2076 = vpow.pop %v2075
  %v2077 = vmul.f32 %v2066, 1.442695
  %v2078 = vpow.pop %v2077
  %v2079 = vmul.f32 %v2067, 1.442695
  %v2080 = vpow.pop %v2079
  %v2081 = vmul.f32 %v2068, 1.442695
  %v2082 = vpow.pop %v2081
  %v2083 = vmul.f32 %v2069, 1.442695
  %v2084 = vpow.pop %v2083
  %v2085 = vmul.f32 %v2070, 1.442695
  %v2086 = vpow.pop %v2085
  %v2087 = vsub.f32 %v2072, 1.0
  %v2088 = vsub.f32 %v2074, 1.0
  %v2089 = vsub.f32 %v2076, 1.0
  %v2090 = vsub.f32 %v2078, 1.0
  %v2091 = vsub.f32 %v2080, 1.0
  %v2092 = vsub.f32 %v2082, 1.0
  %v2093 = vsub.f32 %v2084, 1.0
  %v2094 = vsub.f32 %v2086, 1.0
  %v2095 = vsel %vm2055, %v2047, %v2087
  %v2096 = vsel %vm2056, %v2048, %v2088
  %v2097 = vsel %vm2057, %v2049, %v2089
  %v2098 = vsel %vm2058, %v2050, %v2090
  %v2099 = vsel %vm2059, %v2051, %v2091
  %v2100 = vsel %vm2060, %v2052, %v2092
  %v2101 = vsel %vm2061, %v2053, %v2093
  %v2102 = vsel %vm2062, %v2054, %v2094
  %v2103 = vpack.c.bf16 %v2096, %v2095
  %v2104 = vpack.c.bf16 %v2098, %v2097
  %v2105 = vpack.c.bf16 %v2100, %v2099
  %v2106 = vpack.c.bf16 %v2102, %v2101
  %v2107 = vld [vmem:[%s10] sm:$0x3]
  %v2108 = vld [vmem:[%s9] sm:$0x1]
  %vm2109 = vcmask 523264
  %v2111 = vsel %vm2109, %v2108, 0
  %2113 = vmatprep.subr.bf16.mxu0 0
  %2114 = vmatpush1.bf16.msra.mxu0 %v2103
  %2115 = vmatprep.subr.bf16.mxu0 0
  %2116 = vmatpush1.bf16.msra.mxu0 %v2104
  %2117 = vmatprep.subr.bf16.mxu0 0
  %2118 = vmatpush1.bf16.msra.mxu0 %v2105
  %2119 = vmatprep.subr.bf16.mxu0 0
  %2120 = vmatpush1.bf16.msra.mxu0 %v2106
  %2121 = vmatprep.subr.bf16.mxu0 0
  %2122 = vmatpush1.bf16.msra.mxu0 0
  %2123 = vmatprep.subr.bf16.mxu0 0
  %2124 = vmatpush1.bf16.msra.mxu0 0
  %2125 = vmatprep.subr.bf16.mxu0 0
  %2126 = vmatpush1.bf16.msra.mxu0 0
  %2127 = vmatprep.subr.bf16.mxu0 0
  %2128 = vmatpush1.bf16.msra.mxu0 0
  %2129 = vmatprep.subr.bf16.mxu0 0
  %2130 = vmatpush1.bf16.msra.mxu0 0
  %2131 = vmatprep.subr.bf16.mxu0 0
  %2132 = vmatpush1.bf16.msra.mxu0 0
  %2133 = vmatprep.subr.bf16.mxu0 0
  %2134 = vmatpush1.bf16.msra.mxu0 0
  %2135 = vmatprep.subr.bf16.mxu0 0
  %2136 = vmatpush1.bf16.msra.mxu0 0
  %2137 = vmatprep.subr.bf16.mxu0 0
  %2138 = vmatpush1.bf16.msra.mxu0 0
  %2139 = vmatprep.subr.bf16.mxu0 0
  %2140 = vmatpush1.bf16.msra.mxu0 0
  %2141 = vmatprep.subr.bf16.mxu0 0
  %2142 = vmatpush1.bf16.msra.mxu0 0
  %2143 = vmatprep.subr.bf16.mxu0 0
  %2144 = vmatpush1.bf16.msra.mxu0 0
  %2145 = vmatprep.mubr.bf16.mxu0 0
  %2146 = vmatmul.mubr.bf16.gmra.mrb[0].mxu0 %v2111
  %v2147 = vpop.f32.mrb[0].mxu0
  %v2148 = vadd.f32 0.0, %v2147
  %v2149 = vpop.f32.mrb[0].mxu0
  %v2150 = vpop.f32.mrb[0].mxu0
  %v2151 = vpop.f32.mrb[0].mxu0
  %2152 = vdwg.mxu0
  %2154 = vset.pattern.permute.xlu0 0
  %2155 = vperm.xlu0 %2154, %v2107
  %v2156 = vpop.permute.xlu0 %2155
  %v2158 = vadd.f32 %v2156, %v2148
  %s2159 = scalar_lea.vmem %s9, 1
  %v2160 = vld [vmem:[%s2159] sm:$0x1]
  %2165 = vrot.lane.b32.xlu0 %v2103, 96
  %v2166 = vpop.permute.xlu0 %2165
  %2167 = vrot.lane.b32.xlu0 %v2104, 96
  %v2168 = vpop.permute.xlu0 %2167
  %2169 = vrot.lane.b32.xlu0 %v2105, 96
  %v2170 = vpop.permute.xlu0 %2169
  %2171 = vrot.lane.b32.xlu0 %v2106, 96
  %v2172 = vpop.permute.xlu0 %2171
  %v2178 = vsel %vm2109, %v2160, 0
  %2180 = vmatprep.subr.bf16.mxu0 0
  %2181 = vmatpush1.bf16.msra.mxu0 %v2166
  %2182 = vmatprep.subr.bf16.mxu0 0
  %2183 = vmatpush1.bf16.msra.mxu0 %v2168
  %2184 = vmatprep.subr.bf16.mxu0 0
  %2185 = vmatpush1.bf16.msra.mxu0 %v2170
  %2186 = vmatprep.subr.bf16.mxu0 0
  %2187 = vmatpush1.bf16.msra.mxu0 %v2172
  %2188 = vmatprep.subr.bf16.mxu0 0
  %2189 = vmatpush1.bf16.msra.mxu0 0
  %2190 = vmatprep.subr.bf16.mxu0 0
  %2191 = vmatpush1.bf16.msra.mxu0 0
  %2192 = vmatprep.subr.bf16.mxu0 0
  %2193 = vmatpush1.bf16.msra.mxu0 0
  %2194 = vmatprep.subr.bf16.mxu0 0
  %2195 = vmatpush1.bf16.msra.mxu0 0
  %2196 = vmatprep.subr.bf16.mxu0 0
  %2197 = vmatpush1.bf16.msra.mxu0 0
  %2198 = vmatprep.subr.bf16.mxu0 0
  %2199 = vmatpush1.bf16.msra.mxu0 0
  %2200 = vmatprep.subr.bf16.mxu0 0
  %2201 = vmatpush1.bf16.msra.mxu0 0
  %2202 = vmatprep.subr.bf16.mxu0 0
  %2203 = vmatpush1.bf16.msra.mxu0 0
  %2204 = vmatprep.subr.bf16.mxu0 0
  %2205 = vmatpush1.bf16.msra.mxu0 0
  %2206 = vmatprep.subr.bf16.mxu0 0
  %2207 = vmatpush1.bf16.msra.mxu0 0
  %2208 = vmatprep.subr.bf16.mxu0 0
  %2209 = vmatpush1.bf16.msra.mxu0 0
  %2210 = vmatprep.subr.bf16.mxu0 0
  %2211 = vmatpush1.bf16.msra.mxu0 0
  %2212 = vmatprep.mubr.bf16.mxu0 0
  %2213 = vmatmul.mubr.bf16.gmra.mrb[0].mxu0 %v2178
  %v2214 = vpop.f32.mrb[0].mxu0
  %v2215 = vadd.f32 0.0, %v2214
  %v2216 = vpop.f32.mrb[0].mxu0
  %v2217 = vpop.f32.mrb[0].mxu0
  %v2218 = vpop.f32.mrb[0].mxu0
  %2219 = vdwg.mxu0
  %v2220 = vadd.f32 %v2158, %v2215
  %s2221 = scalar_lea.vmem %s9, 2
  %v2222 = vld [vmem:[%s2221] sm:$0x1]
  %2223 = vrot.lane.b32.xlu0 %v2103, 64
  %v2224 = vpop.permute.xlu0 %2223
  %2225 = vrot.lane.b32.xlu0 %v2104, 64
  %v2226 = vpop.permute.xlu0 %2225
  %2227 = vrot.lane.b32.xlu0 %v2105, 64
  %v2228 = vpop.permute.xlu0 %2227
  %2229 = vrot.lane.b32.xlu0 %v2106, 64
  %v2230 = vpop.permute.xlu0 %2229
  %v2236 = vsel %vm2109, %v2222, 0
  %2238 = vmatprep.subr.bf16.mxu0 0
  %2239 = vmatpush1.bf16.msra.mxu0 %v2224
  %2240 = vmatprep.subr.bf16.mxu0 0
  %2241 = vmatpush1.bf16.msra.mxu0 %v2226
  %2242 = vmatprep.subr.bf16.mxu0 0
  %2243 = vmatpush1.bf16.msra.mxu0 %v2228
  %2244 = vmatprep.subr.bf16.mxu0 0
  %2245 = vmatpush1.bf16.msra.mxu0 %v2230
  %2246 = vmatprep.subr.bf16.mxu0 0
  %2247 = vmatpush1.bf16.msra.mxu0 0
  %2248 = vmatprep.subr.bf16.mxu0 0
  %2249 = vmatpush1.bf16.msra.mxu0 0
  %2250 = vmatprep.subr.bf16.mxu0 0
  %2251 = vmatpush1.bf16.msra.mxu0 0
  %2252 = vmatprep.subr.bf16.mxu0 0
  %2253 = vmatpush1.bf16.msra.mxu0 0
  %2254 = vmatprep.subr.bf16.mxu0 0
  %2255 = vmatpush1.bf16.msra.mxu0 0
  %2256 = vmatprep.subr.bf16.mxu0 0
  %2257 = vmatpush1.bf16.msra.mxu0 0
  %2258 = vmatprep.subr.bf16.mxu0 0
  %2259 = vmatpush1.bf16.msra.mxu0 0
  %2260 = vmatprep.subr.bf16.mxu0 0
  %2261 = vmatpush1.bf16.msra.mxu0 0
  %2262 = vmatprep.subr.bf16.mxu0 0
  %2263 = vmatpush1.bf16.msra.mxu0 0
  %2264 = vmatprep.subr.bf16.mxu0 0
  %2265 = vmatpush1.bf16.msra.mxu0 0
  %2266 = vmatprep.subr.bf16.mxu0 0
  %2267 = vmatpush1.bf16.msra.mxu0 0
  %2268 = vmatprep.subr.bf16.mxu0 0
  %2269 = vmatpush1.bf16.msra.mxu0 0
  %2270 = vmatprep.mubr.bf16.mxu0 0
  %2271 = vmatmul.mubr.bf16.gmra.mrb[0].mxu0 %v2236
  %v2272 = vpop.f32.mrb[0].mxu0
  %v2273 = vadd.f32 0.0, %v2272
  %v2274 = vpop.f32.mrb[0].mxu0
  %v2275 = vpop.f32.mrb[0].mxu0
  %v2276 = vpop.f32.mrb[0].mxu0
  %2277 = vdwg.mxu0
  %v2278 = vadd.f32 %v2220, %v2273
  %s2279 = scalar_lea.vmem %s9, 3
  %v2280 = vld [vmem:[%s2279] sm:$0x1]
  %2281 = vrot.lane.b32.xlu0 %v2103, 32
  %v2282 = vpop.permute.xlu0 %2281
  %2283 = vrot.lane.b32.xlu0 %v2104, 32
  %v2284 = vpop.permute.xlu0 %2283
  %2285 = vrot.lane.b32.xlu0 %v2105, 32
  %v2286 = vpop.permute.xlu0 %2285
  %2287 = vrot.lane.b32.xlu0 %v2106, 32
  %v2288 = vpop.permute.xlu0 %2287
  %v2294 = vsel %vm2109, %v2280, 0
  %2296 = vmatprep.subr.bf16.mxu0 0
  %2297 = vmatpush1.bf16.msra.mxu0 %v2282
  %2298 = vmatprep.subr.bf16.mxu0 0
  %2299 = vmatpush1.bf16.msra.mxu0 %v2284
  %2300 = vmatprep.subr.bf16.mxu0 0
  %2301 = vmatpush1.bf16.msra.mxu0 %v2286
  %2302 = vmatprep.subr.bf16.mxu0 0
  %2303 = vmatpush1.bf16.msra.mxu0 %v2288
  %2304 = vmatprep.subr.bf16.mxu0 0
  %2305 = vmatpush1.bf16.msra.mxu0 0
  %2306 = vmatprep.subr.bf16.mxu0 0
  %2307 = vmatpush1.bf16.msra.mxu0 0
  %2308 = vmatprep.subr.bf16.mxu0 0
  %2309 = vmatpush1.bf16.msra.mxu0 0
  %2310 = vmatprep.subr.bf16.mxu0 0
  %2311 = vmatpush1.bf16.msra.mxu0 0
  %2312 = vmatprep.subr.bf16.mxu0 0
  %2313 = vmatpush1.bf16.msra.mxu0 0
  %2314 = vmatprep.subr.bf16.mxu0 0
  %2315 = vmatpush1.bf16.msra.mxu0 0
  %2316 = vmatprep.subr.bf16.mxu0 0
  %2317 = vmatpush1.bf16.msra.mxu0 0
  %2318 = vmatprep.subr.bf16.mxu0 0
  %2319 = vmatpush1.bf16.msra.mxu0 0
  %2320 = vmatprep.subr.bf16.mxu0 0
  %2321 = vmatpush1.bf16.msra.mxu0 0
  %2322 = vmatprep.subr.bf16.mxu0 0
  %2323 = vmatpush1.bf16.msra.mxu0 0
  %2324 = vmatprep.subr.bf16.mxu0 0
  %2325 = vmatpush1.bf16.msra.mxu0 0
  %2326 = vmatprep.subr.bf16.mxu0 0
  %2327 = vmatpush1.bf16.msra.mxu0 0
  %2328 = vmatprep.mubr.bf16.mxu0 0
  %2329 = vmatmul.mubr.bf16.gmra.mrb[0].mxu0 %v2294
  %v2330 = vpop.f32.mrb[0].mxu0
  %v2331 = vadd.f32 0.0, %v2330
  %v2332 = vpop.f32.mrb[0].mxu0
  %v2333 = vpop.f32.mrb[0].mxu0
  %v2334 = vpop.f32.mrb[0].mxu0
  %2335 = vdwg.mxu0
  %v2336 = vadd.f32 %v2278, %v2331
  %vm2337 = vcmask 9216
  %2338 = vst.msk [vmem:[%s11] sm:$0x3] %vm2337, %v2336
  // Predicated region
  $region46: #{deepconvnet_forward.1} parent=0 // pred_check
    _
  $region47: #{deepconvnet_forward.1} parent=0 // pred_check_branch
    %2340 = sbr.rel (0) target = $region49
  $region48: #{deepconvnet_forward.1} parent=0 // pred_region
    _
  $region49: #{deepconvnet_forward.1} parent=0 // pred_fallthru
    _
  // Predicated region
  $region50: #{deepconvnet_forward.1} parent=0 // pred_check
    _
  $region51: #{deepconvnet_forward.1} parent=0 // pred_check_branch
    %2342 = sbr.rel (0) target = $region53
  $region52: #{deepconvnet_forward.1} parent=0 // pred_region
    _
  $region53: #{deepconvnet_forward.1} parent=0 // pred_fallthru
    _

</llo_original>
